<compile_context>
chip_gen: v7x
topology: tpu7x:2x2x1
jax: 0.10.0
libtpu: 0.0.40
codegen_flags: <defaults>
</compile_context>

<pallas_src>
import functools

import jax
import jax.numpy as jnp
from jax.experimental import pallas as pl
from jax.experimental.pallas import tpu as pltpu


# ----------------------------------------------------------------------------
# Kernel bodies
# ----------------------------------------------------------------------------
def _channel_attention(x_ref, w1t_ref, w2t_ref):
    """Channel attention front end; returns the channel-attended tile in f32."""
    xf = x_ref[...].astype(jnp.float32)                    # (nb, C, HW)
    nb = xf.shape[0]
    avg_p = jnp.mean(xf, axis=2)                           # (nb, C)
    max_p = jnp.max(xf, axis=2)                            # (nb, C)
    # Fused avg/max branches: one dot-relu-dot on a (2*nb, C) LHS.
    p = jnp.concatenate([avg_p, max_p], axis=0)            # (2nb, C)
    h = jnp.maximum(
        jnp.dot(p, w1t_ref[...], preferred_element_type=jnp.float32), 0.0)
    y = jnp.dot(h, w2t_ref[...], preferred_element_type=jnp.float32)
    f1 = jax.nn.sigmoid(y[:nb] + y[nb:])                   # (nb, C)
    return xf * f1[:, :, None]                             # (nb, C, HW) f32


def _cbam_matmul_kernel(x_ref, w1t_ref, w2t_ref, m_ref, out_ref):
    """Spatial 7x7 conv as a single (2*HW, HW) banded-operator matmul."""
    out = _channel_attention(x_ref, w1t_ref, w2t_ref)      # (nb, C, HW) f32
    avg_c = jnp.mean(out, axis=1)                          # (nb, HW)
    max_c = jnp.max(out, axis=1)                           # (nb, HW)
    sa_in = jnp.concatenate([avg_c, max_c], axis=1)        # (nb, 2HW) lane concat
    conv = jnp.dot(sa_in.astype(m_ref.dtype), m_ref[...],
                   preferred_element_type=jnp.float32)     # (nb, HW)
    f2 = jax.nn.sigmoid(conv)
    out_ref[...] = (out * f2[:, None, :]).astype(out_ref.dtype)


def _cbam_roll_kernel(x_ref, w1t_ref, w2t_ref, wsa_ref, out_ref, *,
                      H, W, ksize, pad):
    """Spatial 7x7 conv as 49 shifted taps (pltpu.roll) + masked FMA."""
    HW = H * W
    out = _channel_attention(x_ref, w1t_ref, w2t_ref)      # (nb, C, HW) f32
    nb = out.shape[0]
    avg_c = jnp.mean(out, axis=1)                          # (nb, HW)
    max_c = jnp.max(out, axis=1)                           # (nb, HW)

    pos = jax.lax.broadcasted_iota(jnp.int32, (nb, HW), 1)
    row = pos // W
    col = pos % W

    acc = jnp.zeros((nb, HW), jnp.float32)
    for a in range(ksize):
        dy = a - pad
        rmask = (row + dy >= 0) & (row + dy < H)
        for b in range(ksize):
            dx = b - pad
            d = dy * W + dx                                 # flat input offset
            s = (-d) % HW                                   # jnp.roll-style shift
            av = avg_c if s == 0 else pltpu.roll(avg_c, s, 1)
            mx = max_c if s == 0 else pltpu.roll(max_c, s, 1)
            mask = rmask & (col + dx >= 0) & (col + dx < W)
            tap = (wsa_ref[a * ksize + b] * av
                   + wsa_ref[ksize * ksize + a * ksize + b] * mx)
            acc = acc + jnp.where(mask, tap, 0.0)
    f2 = jax.nn.sigmoid(acc)
    out_ref[...] = (out * f2[:, None, :]).astype(out_ref.dtype)


# ----------------------------------------------------------------------------
# Weight preprocessing: express the 7x7 cross-correlation (zero padding) as a
# packed (2*HW, HW) matrix so that conv == concat([avg, max], -1) @ M.
# ----------------------------------------------------------------------------
def _spatial_conv_as_matmul(wt, H, W, ksize, pad, dtype):
    h_idx = jnp.arange(H)
    w_idx = jnp.arange(W)
    di = h_idx[:, None] - h_idx[None, :] + pad              # (H_in, H_out)
    dj = w_idx[:, None] - w_idx[None, :] + pad              # (W_in, W_out)
    vh = (di >= 0) & (di < ksize)
    vw = (dj >= 0) & (dj < ksize)
    dic = jnp.clip(di, 0, ksize - 1)
    djc = jnp.clip(dj, 0, ksize - 1)
    taps = wt[:, dic[:, None, :, None], djc[None, :, None, :]]
    valid = (vh[:, None, :, None] & vw[None, :, None, :])[None]
    m = jnp.where(valid, taps, 0.0)
    return m.reshape(2 * H * W, H * W).astype(dtype)


# ----------------------------------------------------------------------------
# Per-chip info (VMEM capacity, TensorCores per chip), with safe fallbacks.
# ----------------------------------------------------------------------------
def _chip_info():
    vmem_bytes = 64 << 20          # conservative default (v7x per-TC VMEM)
    num_tc = 1                     # v5e / v6e: one TensorCore per chip
    try:
        info = pltpu.get_tpu_info()
        for name in ("vmem_capacity_bytes", "vmem_size_bytes", "vmem_bytes"):
            v = getattr(info, name, None)
            if v:
                vmem_bytes = int(v)
                break
        for name in ("num_cores", "tensorcores_per_chip", "num_tensorcores",
                     "cores_per_chip"):
            v = getattr(info, name, None)
            if v:
                num_tc = int(v)
                break
    except Exception:
        pass
    try:
        if "v7" in jax.devices()[0].device_kind.lower():
            num_tc = max(num_tc, 2)
    except Exception:
        pass
    vmem_bytes = min(max(vmem_bytes, 16 << 20), 256 << 20)
    num_tc = min(max(num_tc, 1), 2)
    return vmem_bytes, num_tc


# ----------------------------------------------------------------------------
# Wrapper
# ----------------------------------------------------------------------------
def cbam_pallas(x, w1, w2, wsa, *, kernel_size=7, padding=3):
    N, C, H, W = x.shape
    HW = H * W
    Cr = w1.shape[0]
    io_dtype = x.dtype
    esize = jnp.dtype(io_dtype).itemsize

    x2 = x.reshape(N, C, HW)                               # caller dtype end-to-end
    w1t = w1.astype(jnp.float32).T                         # (C, Cr)
    w2t = w2.astype(jnp.float32).T                         # (Cr, C)

    m_dtype = jnp.float32 if io_dtype == jnp.float32 else jnp.bfloat16
    m_esize = jnp.dtype(m_dtype).itemsize

    vmem_cap, num_tc = _chip_info()
    vmem_limit = int(min(vmem_cap * 3 // 4, 100 << 20))    # ~48 MiB v7x, ~96 MiB v5e/v6e

    # ---- choose the spatial-attention formulation ---------------------------
    op_bytes = 2 * HW * HW * m_esize                       # dense banded operator
    x_bytes = N * C * HW * esize
    operator_fits = 2 * op_bytes <= vmem_limit // 3        # enforce O((HW)^2) limit
    use_matmul = operator_fits and x_bytes >= 4 * op_bytes

    # ---- batches per grid step (nb) against the per-chip VMEM budget --------
    fixed = (2 * op_bytes if use_matmul else 0) + 4 * C * Cr * 4 + (1 << 20)
    per_batch = 4 * C * HW * esize + 3 * C * HW * 4        # dbl-buffered IO + f32 temps
    budget = max(per_batch, vmem_limit - fixed - (6 << 20))
    nb = max(1, min(N, budget // per_batch))
    if num_tc > 1 and N > 1:
        # v7x megacore: keep >= num_tc (ideally 2*num_tc) blocks and prefer a
        # block count that is a multiple of the TensorCore count.
        min_blocks = 2 * num_tc if N >= 2 * num_tc else num_tc
        if N >= min_blocks:
            nb = max(1, min(nb, N // min_blocks))
        while nb > 1 and (-(-N // nb)) % num_tc != 0:
            nb -= 1
    grid = (pl.cdiv(N, nb),)                               # ragged tail is fine

    cost = pl.CostEstimate(
        flops=int(N * (8 * C * Cr + 4 * HW * HW + 4 * C * HW)),
        transcendentals=int(N * (C + HW)),
        bytes_accessed=int(2 * N * C * HW * esize
                           + (op_bytes if use_matmul else 0)),
    )
    cparams = pltpu.CompilerParams(
        dimension_semantics=("parallel",),
        vmem_limit_bytes=vmem_limit,
    )
    out_shape = jax.ShapeDtypeStruct((N, C, HW), io_dtype)
    io_spec = pl.BlockSpec((nb, C, HW), lambda n: (n, 0, 0))

    def const_spec(shape, single_buffer):
        idx = lambda n, _nd=len(shape): (0,) * _nd
        if single_buffer:
            return pl.BlockSpec(shape, idx, pipeline_mode=pl.Buffered(1))
        return pl.BlockSpec(shape, idx)

    def run_matmul(single_buffer):
        m = _spatial_conv_as_matmul(
            wsa.astype(jnp.float32).reshape(2, kernel_size, kernel_size),
            H, W, kernel_size, padding, m_dtype)            # (2*HW, HW)
        return pl.pallas_call(
            _cbam_matmul_kernel,
            out_shape=out_shape,
            grid_spec=pltpu.PrefetchScalarGridSpec(
                num_scalar_prefetch=0,
                grid=grid,
                in_specs=[
                    io_spec,
                    const_spec((C, Cr), single_buffer),
                    const_spec((Cr, C), single_buffer),
                    const_spec((2 * HW, HW), single_buffer),
                ],
                out_specs=io_spec,
            ),
            compiler_params=cparams,
            cost_estimate=cost,
        )(x2, w1t, w2t, m)

    def run_roll(single_buffer):
        wsa_flat = wsa.astype(jnp.float32).reshape(-1)      # (2*k*k,) -> SMEM
        kern = functools.partial(_cbam_roll_kernel, H=H, W=W,
                                 ksize=kernel_size, pad=padding)
        return pl.pallas_call(
            kern,
            out_shape=out_shape,
            grid_spec=pltpu.PrefetchScalarGridSpec(
                num_scalar_prefetch=0,
                grid=grid,
                in_specs=[
                    io_spec,
                    const_spec((C, Cr), single_buffer),
                    const_spec((Cr, C), single_buffer),
                    pl.BlockSpec(memory_space=pltpu.MemorySpace.SMEM),
                ],
                out_specs=io_spec,
            ),
            compiler_params=cparams,
            cost_estimate=cost,
        )(x2, w1t, w2t, wsa_flat)

    if use_matmul:
        attempts = [lambda: run_matmul(True), lambda: run_matmul(False)]
    else:
        attempts = [lambda: run_roll(True), lambda: run_roll(False)]
        if operator_fits:  # safety net: known-good matmul formulation
            attempts += [lambda: run_matmul(True), lambda: run_matmul(False)]

    out2, err = None, None
    for attempt in attempts:
        try:
            out2 = jax.block_until_ready(attempt())
            break
        except Exception as e:      # fall back (e.g. Buffered(1) unsupported)
            err = e
    if out2 is None:
        raise err
    return out2.reshape(N, C, H, W)


# ----------------------------------------------------------------------------
# Pure-JAX reference (mirrors the PyTorch module exactly)
# ----------------------------------------------------------------------------
def cbam_ref(x, w1, w2, wsa, *, kernel_size=7, padding=3):
    avg = jnp.mean(x, axis=(2, 3), keepdims=True)           # (N, C, 1, 1)
    mx = jnp.max(x, axis=(2, 3), keepdims=True)

    def mlp(v):
        h = jnp.einsum('oc,nchw->nohw', w1, v)
        h = jnp.maximum(h, 0.0)
        return jnp.einsum('oc,nchw->nohw', w2, h)

    f1 = jax.nn.sigmoid(mlp(avg) + mlp(mx))
    out = x * f1

    avg_c = jnp.mean(out, axis=1, keepdims=True)
    max_c = jnp.max(out, axis=1, keepdims=True)
    sa_in = jnp.concatenate([avg_c, max_c], axis=1)          # (N, 2, H, W)
    conv = jax.lax.conv_general_dilated(
        sa_in, wsa.reshape(1, 2, kernel_size, kernel_size),
        window_strides=(1, 1),
        padding=((padding, padding), (padding, padding)),
        dimension_numbers=('NCHW', 'OIHW', 'NCHW'))
    f2 = jax.nn.sigmoid(conv)
    return out * f2


if __name__ == "__main__":
    N, C, H, W = 2, 32, 16, 16
    reduction = 16
    Cr = C // reduction
    ksize, pad = 7, 3

    key = jax.random.PRNGKey(0)
    kx, k1, k2, k3 = jax.random.split(key, 4)
    x = jax.random.normal(kx, (N, C, H, W), dtype=jnp.float32)
    # Deterministic synthetic parameters (shapes from the module __init__).
    w1 = jax.random.normal(k1, (Cr, C), dtype=jnp.float32) * 0.2   # Conv2d(C, C//r, 1)
    w2 = jax.random.normal(k2, (C, Cr), dtype=jnp.float32) * 0.2   # Conv2d(C//r, C, 1)
    wsa = jax.random.normal(k3, (2 * ksize * ksize,), dtype=jnp.float32) * 0.1  # Conv2d(2,1,7)

    result = cbam_pallas(x, w1, w2, wsa, kernel_size=ksize, padding=pad)
    result = jax.block_until_ready(result)

    ref = cbam_ref(x, w1, w2, wsa, kernel_size=ksize, padding=pad)
    assert result.shape == (N, C, H, W)
    max_err = float(jnp.max(jnp.abs(result - ref)))
    assert jnp.allclose(result, ref, rtol=1e-4, atol=1e-4), max_err
    print("KERNEL_OK")
</pallas_src>

<mosaic_0001>
module attributes {stable_mosaic.version = 11 : i64} {
  func.func @_cbam_matmul_kernel(%arg0: i32, %arg1: memref<2x32x256xf32, #tpu.memory_space<vmem>>, %arg2: memref<32x2xf32, #tpu.memory_space<vmem>>, %arg3: memref<2x32xf32, #tpu.memory_space<vmem>>, %arg4: memref<512x256xf32, #tpu.memory_space<vmem>>, %arg5: memref<2x32x256xf32, #tpu.memory_space<vmem>>) attributes {dimension_semantics = [#tpu.dimension_semantics<parallel>], iteration_bounds = array<i64: 1>, scalar_prefetch = 0 : i64, scratch_operands = 0 : i64, tpu.core_type = #tpu.core_type<tc>, window_params = [{transform_indices = @transform_0, window_bounds = array<i64: 2, 32, 256>}, {pipeline_mode = #tpu.pipeline_mode<synchronous>, transform_indices = @transform_1, window_bounds = array<i64: 32, 2>}, {pipeline_mode = #tpu.pipeline_mode<synchronous>, transform_indices = @transform_2, window_bounds = array<i64: 2, 32>}, {pipeline_mode = #tpu.pipeline_mode<synchronous>, transform_indices = @transform_3, window_bounds = array<i64: 512, 256>}, {transform_indices = @transform_4, window_bounds = array<i64: 2, 32, 256>}]} {
    %c0 = arith.constant 0 : index
    %c0_0 = arith.constant 0 : index
    %c0_1 = arith.constant 0 : index
    %0 = vector.load %arg1[%c0, %c0_0, %c0_1] : memref<2x32x256xf32, #tpu.memory_space<vmem>>, vector<2x32x256xf32>
    %cst = arith.constant dense<0.000000e+00> : vector<2x32xf32>
    %1 = vector.multi_reduction <add>, %0, %cst [2] : vector<2x32x256xf32> to vector<2x32xf32>
    %cst_2 = arith.constant 2.560000e+02 : f32
    %2 = vector.broadcast %cst_2 : f32 to vector<2x32xf32>
    %3 = arith.divf %1, %2 : vector<2x32xf32>
    %cst_3 = arith.constant dense<0xFF800000> : vector<2x32xf32>
    %4 = vector.multi_reduction <maximumf>, %0, %cst_3 [2] : vector<2x32x256xf32> to vector<2x32xf32>
    %5 = tpu.concatenate %3, %4 in 0 : vector<2x32xf32>, vector<2x32xf32> -> vector<4x32xf32>
    %c0_4 = arith.constant 0 : index
    %c0_5 = arith.constant 0 : index
    %6 = vector.load %arg2[%c0_4, %c0_5] : memref<32x2xf32, #tpu.memory_space<vmem>>, vector<32x2xf32>
    %cst_6 = arith.constant dense<0.000000e+00> : vector<4x2xf32>
    %7 = tpu.matmul %5, %6, %cst_6 {dimension_numbers = #tpu.dot_dimension_numbers<[1], [0], [0], [1], [0, 0, 1, 1], [], []>} : vector<4x32xf32>, vector<32x2xf32>, vector<4x2xf32> -> vector<4x2xf32>
    %cst_7 = arith.constant 0.000000e+00 : f32
    %8 = vector.broadcast %cst_7 : f32 to vector<4x2xf32>
    %9 = arith.maximumf %7, %8 : vector<4x2xf32>
    %c0_8 = arith.constant 0 : index
    %c0_9 = arith.constant 0 : index
    %10 = vector.load %arg3[%c0_8, %c0_9] : memref<2x32xf32, #tpu.memory_space<vmem>>, vector<2x32xf32>
    %cst_10 = arith.constant dense<0.000000e+00> : vector<4x32xf32>
    %11 = tpu.matmul %9, %10, %cst_10 {dimension_numbers = #tpu.dot_dimension_numbers<[1], [0], [0], [1], [0, 0, 1, 1], [], []>} : vector<4x2xf32>, vector<2x32xf32>, vector<4x32xf32> -> vector<4x32xf32>
    %12 = vector.extract_strided_slice %11 {offsets = [0, 0], sizes = [2, 32], strides = [1, 1]} : vector<4x32xf32> to vector<2x32xf32>
    %13 = vector.extract_strided_slice %11 {offsets = [2, 0], sizes = [2, 32], strides = [1, 1]} : vector<4x32xf32> to vector<2x32xf32>
    %14 = arith.addf %12, %13 : vector<2x32xf32>
    %15 = arith.negf %14 : vector<2x32xf32>
    %16 = math.exp %15 : vector<2x32xf32>
    %cst_11 = arith.constant 1.000000e+00 : f32
    %17 = vector.broadcast %cst_11 : f32 to vector<2x32xf32>
    %18 = arith.addf %17, %16 : vector<2x32xf32>
    %19 = arith.divf %17, %18 : vector<2x32xf32>
    %20 = vector.shape_cast %19 : vector<2x32xf32> to vector<2x32x1xf32>
    %21 = vector.broadcast %20 : vector<2x32x1xf32> to vector<2x32x256xf32>
    %22 = arith.mulf %0, %21 : vector<2x32x256xf32>
    %cst_12 = arith.constant dense<0.000000e+00> : vector<2x256xf32>
    %23 = vector.multi_reduction <add>, %22, %cst_12 [1] : vector<2x32x256xf32> to vector<2x256xf32>
    %cst_13 = arith.constant 3.200000e+01 : f32
    %24 = vector.broadcast %cst_13 : f32 to vector<2x256xf32>
    %25 = arith.divf %23, %24 : vector<2x256xf32>
    %cst_14 = arith.constant dense<0xFF800000> : vector<2x256xf32>
    %26 = vector.multi_reduction <maximumf>, %22, %cst_14 [1] : vector<2x32x256xf32> to vector<2x256xf32>
    %27 = tpu.concatenate %25, %26 in 1 : vector<2x256xf32>, vector<2x256xf32> -> vector<2x512xf32>
    %c0_15 = arith.constant 0 : index
    %c0_16 = arith.constant 0 : index
    %28 = vector.load %arg4[%c0_15, %c0_16] : memref<512x256xf32, #tpu.memory_space<vmem>>, vector<512x256xf32>
    %cst_17 = arith.constant dense<0.000000e+00> : vector<2x256xf32>
    %29 = tpu.matmul %27, %28, %cst_17 {dimension_numbers = #tpu.dot_dimension_numbers<[1], [0], [0], [1], [0, 0, 1, 1], [], []>} : vector<2x512xf32>, vector<512x256xf32>, vector<2x256xf32> -> vector<2x256xf32>
    %30 = arith.negf %29 : vector<2x256xf32>
    %31 = math.exp %30 : vector<2x256xf32>
    %cst_18 = arith.constant 1.000000e+00 : f32
    %32 = vector.broadcast %cst_18 : f32 to vector<2x256xf32>
    %33 = arith.addf %32, %31 : vector<2x256xf32>
    %34 = arith.divf %32, %33 : vector<2x256xf32>
    %35 = vector.shape_cast %34 : vector<2x256xf32> to vector<2x1x256xf32>
    %36 = vector.broadcast %35 : vector<2x1x256xf32> to vector<2x32x256xf32>
    %37 = arith.mulf %22, %36 : vector<2x32x256xf32>
    %c0_19 = arith.constant 0 : index
    %c0_20 = arith.constant 0 : index
    %c0_21 = arith.constant 0 : index
    %38 = vector.load %arg5[%c0_19, %c0_20, %c0_21] : memref<2x32x256xf32, #tpu.memory_space<vmem>>, vector<2x32x256xf32>
    tpu.vector_store %arg5[%c0_19, %c0_20, %c0_21], %37 {strides = array<i32>} : memref<2x32x256xf32, #tpu.memory_space<vmem>>, vector<2x32x256xf32>,
    return
  }
  func.func @transform_0(%arg0: i32) -> (i32, i32, i32) {
    %c0_i32 = arith.constant 0 : i32
    %c0_i32_0 = arith.constant 0 : i32
    %c0_i32_1 = arith.constant 0 : i32
    return %arg0, %c0_i32, %c0_i32_0 : i32, i32, i32
  }
  func.func @transform_1(%arg0: i32) -> (i32, i32) {
    %c0_i32 = arith.constant 0 : i32
    %c0_i32_0 = arith.constant 0 : i32
    %c0_i32_1 = arith.constant 0 : i32
    return %c0_i32, %c0_i32_0 : i32, i32
  }
  func.func @transform_2(%arg0: i32) -> (i32, i32) {
    %c0_i32 = arith.constant 0 : i32
    %c0_i32_0 = arith.constant 0 : i32
    %c0_i32_1 = arith.constant 0 : i32
    return %c0_i32, %c0_i32_0 : i32, i32
  }
  func.func @transform_3(%arg0: i32) -> (i32, i32) {
    %c0_i32 = arith.constant 0 : i32
    %c0_i32_0 = arith.constant 0 : i32
    %c0_i32_1 = arith.constant 0 : i32
    return %c0_i32, %c0_i32_0 : i32, i32
  }
  func.func @transform_4(%arg0: i32) -> (i32, i32, i32) {
    %c0_i32 = arith.constant 0 : i32
    %c0_i32_0 = arith.constant 0 : i32
    %c0_i32_1 = arith.constant 0 : i32
    return %arg0, %c0_i32, %c0_i32_0 : i32, i32, i32
  }
}

module attributes {stable_mosaic.version = 11 : i64} {
  func.func @_cbam_matmul_kernel(%arg0: i32, %arg1: memref<2x32x256xf32, #tpu.memory_space<vmem>>, %arg2: memref<32x2xf32, #tpu.memory_space<vmem>>, %arg3: memref<2x32xf32, #tpu.memory_space<vmem>>, %arg4: memref<512x256xf32, #tpu.memory_space<vmem>>, %arg5: memref<2x32x256xf32, #tpu.memory_space<vmem>>) attributes {dimension_semantics = [#tpu.dimension_semantics<parallel>], iteration_bounds = array<i64: 1>, scalar_prefetch = 0 : i64, scratch_operands = 0 : i64, tpu.core_type = #tpu.core_type<tc>, window_params = [{transform_indices = @transform_0, window_bounds = array<i64: 2, 32, 256>}, {pipeline_mode = #tpu.pipeline_mode<synchronous>, transform_indices = @transform_1, window_bounds = array<i64: 32, 2>}, {pipeline_mode = #tpu.pipeline_mode<synchronous>, transform_indices = @transform_2, window_bounds = array<i64: 2, 32>}, {pipeline_mode = #tpu.pipeline_mode<synchronous>, transform_indices = @transform_3, window_bounds = array<i64: 512, 256>}, {transform_indices = @transform_4, window_bounds = array<i64: 2, 32, 256>}]} {
    %c0 = arith.constant 0 : index
    %c0_0 = arith.constant 0 : index
    %c0_1 = arith.constant 0 : index
    %0 = vector.load %arg1[%c0, %c0_0, %c0_1] : memref<2x32x256xf32, #tpu.memory_space<vmem>>, vector<2x32x256xf32>
    %cst = arith.constant dense<0.000000e+00> : vector<2x32xf32>
    %1 = vector.multi_reduction <add>, %0, %cst [2] : vector<2x32x256xf32> to vector<2x32xf32>
    %cst_2 = arith.constant 2.560000e+02 : f32
    %2 = vector.broadcast %cst_2 : f32 to vector<2x32xf32>
    %3 = arith.divf %1, %2 : vector<2x32xf32>
    %cst_3 = arith.constant dense<0xFF800000> : vector<2x32xf32>
    %4 = vector.multi_reduction <maximumf>, %0, %cst_3 [2] : vector<2x32x256xf32> to vector<2x32xf32>
    %5 = tpu.concatenate %3, %4 in 0 : vector<2x32xf32>, vector<2x32xf32> -> vector<4x32xf32>
    %c0_4 = arith.constant 0 : index
    %c0_5 = arith.constant 0 : index
    %6 = vector.load %arg2[%c0_4, %c0_5] : memref<32x2xf32, #tpu.memory_space<vmem>>, vector<32x2xf32>
    %cst_6 = arith.constant dense<0.000000e+00> : vector<4x2xf32>
    %7 = tpu.matmul %5, %6, %cst_6 {dimension_numbers = #tpu.dot_dimension_numbers<[1], [0], [0], [1], [0, 0, 1, 1], [], []>} : vector<4x32xf32>, vector<32x2xf32>, vector<4x2xf32> -> vector<4x2xf32>
    %cst_7 = arith.constant 0.000000e+00 : f32
    %8 = vector.broadcast %cst_7 : f32 to vector<4x2xf32>
    %9 = arith.maximumf %7, %8 : vector<4x2xf32>
    %c0_8 = arith.constant 0 : index
    %c0_9 = arith.constant 0 : index
    %10 = vector.load %arg3[%c0_8, %c0_9] : memref<2x32xf32, #tpu.memory_space<vmem>>, vector<2x32xf32>
    %cst_10 = arith.constant dense<0.000000e+00> : vector<4x32xf32>
    %11 = tpu.matmul %9, %10, %cst_10 {dimension_numbers = #tpu.dot_dimension_numbers<[1], [0], [0], [1], [0, 0, 1, 1], [], []>} : vector<4x2xf32>, vector<2x32xf32>, vector<4x32xf32> -> vector<4x32xf32>
    %12 = vector.extract_strided_slice %11 {offsets = [0, 0], sizes = [2, 32], strides = [1, 1]} : vector<4x32xf32> to vector<2x32xf32>
    %13 = vector.extract_strided_slice %11 {offsets = [2, 0], sizes = [2, 32], strides = [1, 1]} : vector<4x32xf32> to vector<2x32xf32>
    %14 = arith.addf %12, %13 : vector<2x32xf32>
    %15 = arith.negf %14 : vector<2x32xf32>
    %16 = math.exp %15 : vector<2x32xf32>
    %cst_11 = arith.constant 1.000000e+00 : f32
    %17 = vector.broadcast %cst_11 : f32 to vector<2x32xf32>
    %18 = arith.addf %17, %16 : vector<2x32xf32>
    %19 = arith.divf %17, %18 : vector<2x32xf32>
    %20 = vector.shape_cast %19 : vector<2x32xf32> to vector<2x32x1xf32>
    %21 = vector.broadcast %20 : vector<2x32x1xf32> to vector<2x32x256xf32>
    %22 = arith.mulf %0, %21 : vector<2x32x256xf32>
    %cst_12 = arith.constant dense<0.000000e+00> : vector<2x256xf32>
    %23 = vector.multi_reduction <add>, %22, %cst_12 [1] : vector<2x32x256xf32> to vector<2x256xf32>
    %cst_13 = arith.constant 3.200000e+01 : f32
    %24 = vector.broadcast %cst_13 : f32 to vector<2x256xf32>
    %25 = arith.divf %23, %24 : vector<2x256xf32>
    %cst_14 = arith.constant dense<0xFF800000> : vector<2x256xf32>
    %26 = vector.multi_reduction <maximumf>, %22, %cst_14 [1] : vector<2x32x256xf32> to vector<2x256xf32>
    %27 = tpu.concatenate %25, %26 in 1 : vector<2x256xf32>, vector<2x256xf32> -> vector<2x512xf32>
    %c0_15 = arith.constant 0 : index
    %c0_16 = arith.constant 0 : index
    %28 = vector.load %arg4[%c0_15, %c0_16] : memref<512x256xf32, #tpu.memory_space<vmem>>, vector<512x256xf32>
    %cst_17 = arith.constant dense<0.000000e+00> : vector<2x256xf32>
    %29 = tpu.matmul %27, %28, %cst_17 {dimension_numbers = #tpu.dot_dimension_numbers<[1], [0], [0], [1], [0, 0, 1, 1], [], []>} : vector<2x512xf32>, vector<512x256xf32>, vector<2x256xf32> -> vector<2x256xf32>
    %30 = arith.negf %29 : vector<2x256xf32>
    %31 = math.exp %30 : vector<2x256xf32>
    %cst_18 = arith.constant 1.000000e+00 : f32
    %32 = vector.broadcast %cst_18 : f32 to vector<2x256xf32>
    %33 = arith.addf %32, %31 : vector<2x256xf32>
    %34 = arith.divf %32, %33 : vector<2x256xf32>
    %35 = vector.shape_cast %34 : vector<2x256xf32> to vector<2x1x256xf32>
    %36 = vector.broadcast %35 : vector<2x1x256xf32> to vector<2x32x256xf32>
    %37 = arith.mulf %22, %36 : vector<2x32x256xf32>
    %c0_19 = arith.constant 0 : index
    %c0_20 = arith.constant 0 : index
    %c0_21 = arith.constant 0 : index
    %38 = vector.load %arg5[%c0_19, %c0_20, %c0_21] : memref<2x32x256xf32, #tpu.memory_space<vmem>>, vector<2x32x256xf32>
    tpu.vector_store %arg5[%c0_19, %c0_20, %c0_21], %37 {strides = array<i32>} : memref<2x32x256xf32, #tpu.memory_space<vmem>>, vector<2x32x256xf32>,
    return
  }
  func.func @transform_0(%arg0: i32) -> (i32, i32, i32) {
    %c0_i32 = arith.constant 0 : i32
    %c0_i32_0 = arith.constant 0 : i32
    %c0_i32_1 = arith.constant 0 : i32
    return %arg0, %c0_i32, %c0_i32_0 : i32, i32, i32
  }
  func.func @transform_1(%arg0: i32) -> (i32, i32) {
    %c0_i32 = arith.constant 0 : i32
    %c0_i32_0 = arith.constant 0 : i32
    %c0_i32_1 = arith.constant 0 : i32
    return %c0_i32, %c0_i32_0 : i32, i32
  }
  func.func @transform_2(%arg0: i32) -> (i32, i32) {
    %c0_i32 = arith.constant 0 : i32
    %c0_i32_0 = arith.constant 0 : i32
    %c0_i32_1 = arith.constant 0 : i32
    return %c0_i32, %c0_i32_0 : i32, i32
  }
  func.func @transform_3(%arg0: i32) -> (i32, i32) {
    %c0_i32 = arith.constant 0 : i32
    %c0_i32_0 = arith.constant 0 : i32
    %c0_i32_1 = arith.constant 0 : i32
    return %c0_i32, %c0_i32_0 : i32, i32
  }
  func.func @transform_4(%arg0: i32) -> (i32, i32, i32) {
    %c0_i32 = arith.constant 0 : i32
    %c0_i32_0 = arith.constant 0 : i32
    %c0_i32_1 = arith.constant 0 : i32
    return %arg0, %c0_i32, %c0_i32_0 : i32, i32, i32
  }
}

</mosaic_0001>

<llo_original>
// kernel: tpu_custom_call.1
$region0: #{tpu_custom_call.1}
  #allocation0 [shape = 'u32[]', space=smem, size = 0x4, offset = 0x4, fixed_abs, tag = 'smem constant byte address 0x4 - core index']
  #allocation1 [shape = 'u32[144,128]{1,0:T(1,128)}', space=vmem, size = 0x12000, scoped, tag = 'internal scratch']
  %s0 = inlined_call_operand.hbm [shape: f32[2,32,256], index: 0, kind: input, shape index: {}]
  %s1 = inlined_call_operand.vmem [shape: f32[32,2], index: 1, kind: input, shape index: {}]
  %s2 = inlined_call_operand.vmem [shape: f32[2,32], index: 2, kind: input, shape index: {}]
  %s3 = inlined_call_operand.hbm [shape: f32[512,256], index: 3, kind: input, shape index: {}]
  %s4 = inlined_call_operand.hbm [shape: f32[2,32,256], index: 4, kind: output, shape index: {}]
  %s5 = sld [smem:[#allocation0]]
  $region34: #{tpu_custom_call.1} parent=0
    _
  %s7 = ssub.s32 1, %s5
  %s8 = scalar_select 0, %s7, %s5
  $region1: #{tpu_custom_call.1} parent=0
    #allocation2 [shape = 'u8[65536]{0}', space=vmem, size = 0x10000, scoped, tag = 'input window, operand 0, single buffered']
    #allocation3 [shape = 's32[1]{0}', space=sflag, size = 0x4, scoped, tag = 'scoped memory for tpu_custom_call.1']
    #allocation4 [shape = 's32[1]{0}', space=sflag, size = 0x4, scoped, tag = 'scoped memory for tpu_custom_call.1']
    #allocation5 [shape = 'u8[524288]{0}', space=vmem, size = 0x80000, scoped, tag = 'input window, operand 3, single buffered']
    #allocation6 [shape = 's32[1]{0}', space=sflag, size = 0x4, scoped, tag = 'scoped memory for tpu_custom_call.1']
    #allocation7 [shape = 'u8[65536]{0}', space=vmem, size = 0x10000, scoped, tag = 'output window, operand 0, single buffered']
    %9 = vsyncpa [#allocation3], 0
    %10 = vsyncpa [#allocation6], 0
    %11 = vsyncpa [#allocation4], 0
    // Predicated region
    $region2: #{tpu_custom_call.1} parent=1 // pred_check
      _
    $region3: #{tpu_custom_call.1} parent=1 // pred_check_branch
      %13 = sbr.rel (0) target = $region5
    $region4: #{tpu_custom_call.1} parent=1 // pred_region
      %s15 = ssub.s32 2048, 2048
      %16 = vsyncadd [#allocation3], %s15
      %s17 = sshll.u32 [#allocation2], 4
      %s18 = int_to_ptr.vmem [resolvable:$true] %s17
      %23 = dma.hbm_to_vmem [thread:$0]  %s0, 2048, %s18, [#allocation3], 256, 256, 16
    $region5: #{tpu_custom_call.1} parent=1 // pred_fallthru
      _
    // Predicated region
    $region6: #{tpu_custom_call.1} parent=1 // pred_check
      _
    $region7: #{tpu_custom_call.1} parent=1 // pred_check_branch
      %25 = sbr.rel (0) target = $region9
    $region8: #{tpu_custom_call.1} parent=1 // pred_region
      _
    $region9: #{tpu_custom_call.1} parent=1 // pred_fallthru
      _
    // Predicated region
    $region10: #{tpu_custom_call.1} parent=1 // pred_check
      _
    $region11: #{tpu_custom_call.1} parent=1 // pred_check_branch
      %27 = sbr.rel (0) target = $region13
    $region12: #{tpu_custom_call.1} parent=1 // pred_region
      _
    $region13: #{tpu_custom_call.1} parent=1 // pred_fallthru
      _
    // Predicated region
    $region14: #{tpu_custom_call.1} parent=1 // pred_check
      _
    $region15: #{tpu_custom_call.1} parent=1 // pred_check_branch
      %29 = sbr.rel (0) target = $region17
    $region16: #{tpu_custom_call.1} parent=1 // pred_region
      %s31 = ssub.s32 16384, 16384
      %32 = vsyncadd [#allocation6], %s31
      %s33 = sshll.u32 [#allocation5], 4
      %s34 = int_to_ptr.vmem [resolvable:$true] %s33
      %39 = dma.hbm_to_vmem [thread:$0]  %s3, 16384, %s34, [#allocation6], 256, 256, 16
    $region17: #{tpu_custom_call.1} parent=1 // pred_fallthru
      _
    // Predicated region
    $region18: #{tpu_custom_call.1} parent=1 // pred_check
      _
    $region19: #{tpu_custom_call.1} parent=1 // pred_check_branch
      %41 = sbr.rel (0) target = $region21
    $region20: #{tpu_custom_call.1} parent=1 // pred_region
      %42 = dma.done [#allocation3], 2048
    $region21: #{tpu_custom_call.1} parent=1 // pred_fallthru
      _
    // Predicated region
    $region22: #{tpu_custom_call.1} parent=1 // pred_check
      _
    $region23: #{tpu_custom_call.1} parent=1 // pred_check_branch
      %44 = sbr.rel (0) target = $region25
    $region24: #{tpu_custom_call.1} parent=1 // pred_region
      %45 = dma.done [#allocation6], 16384
    $region25: #{tpu_custom_call.1} parent=1 // pred_fallthru
      _
    %v46 = vld [vmem:[#allocation2] sm:$0xff]
    %v47 = vld [vmem:[#allocation2 + $0x8] sm:$0xff]
    %v48 = vld [vmem:[#allocation2 + $0x10] sm:$0xff]
    %v49 = vld [vmem:[#allocation2 + $0x18] sm:$0xff]
    %v50 = vld [vmem:[#allocation2 + $0x20] sm:$0xff]
    %v51 = vld [vmem:[#allocation2 + $0x28] sm:$0xff]
    %v52 = vld [vmem:[#allocation2 + $0x30] sm:$0xff]
    %v53 = vld [vmem:[#allocation2 + $0x38] sm:$0xff]
    %v54 = vld [vmem:[#allocation2 + $0x40] sm:$0xff]
    %v55 = vld [vmem:[#allocation2 + $0x48] sm:$0xff]
    %v56 = vld [vmem:[#allocation2 + $0x50] sm:$0xff]
    %v57 = vld [vmem:[#allocation2 + $0x58] sm:$0xff]
    %v58 = vld [vmem:[#allocation2 + $0x60] sm:$0xff]
    %v59 = vld [vmem:[#allocation2 + $0x68] sm:$0xff]
    %v60 = vld [vmem:[#allocation2 + $0x70] sm:$0xff]
    %v61 = vld [vmem:[#allocation2 + $0x78] sm:$0xff]
    %v62 = vadd.f32 %v46, %v47
    %63 = vadd.xlane.f32.xlu0 %v62
    %v64 = vpop.xlane.xlu0 %63
    %v65 = vadd.f32 %v48, %v49
    %66 = vadd.xlane.f32.xlu0 %v65
    %v67 = vpop.xlane.xlu0 %66
    %v68 = vadd.f32 %v50, %v51
    %69 = vadd.xlane.f32.xlu0 %v68
    %v70 = vpop.xlane.xlu0 %69
    %v71 = vadd.f32 %v52, %v53
    %72 = vadd.xlane.f32.xlu0 %v71
    %v73 = vpop.xlane.xlu0 %72
    %v74 = vadd.f32 %v54, %v55
    %75 = vadd.xlane.f32.xlu0 %v74
    %v76 = vpop.xlane.xlu0 %75
    %v77 = vadd.f32 %v56, %v57
    %78 = vadd.xlane.f32.xlu0 %v77
    %v79 = vpop.xlane.xlu0 %78
    %v80 = vadd.f32 %v58, %v59
    %81 = vadd.xlane.f32.xlu0 %v80
    %v82 = vpop.xlane.xlu0 %81
    %v83 = vadd.f32 %v60, %v61
    %84 = vadd.xlane.f32.xlu0 %v83
    %v85 = vpop.xlane.xlu0 %84
    %v86 = vrcp.pop 256.0
    %v87 = vmul.f32 %v64, %v86
    %v88 = vmul.f32 %v67, %v86
    %v89 = vmul.f32 %v70, %v86
    %v90 = vmul.f32 %v73, %v86
    %v91 = vmul.f32 %v76, %v86
    %v92 = vmul.f32 %v79, %v86
    %v93 = vmul.f32 %v82, %v86
    %v94 = vmul.f32 %v85, %v86
    %v95 = vmax.f32 %v46, %v47
    %96 = vmax.xlane.f32.xlu0 %v95
    %v97 = vpop.xlane.xlu0 %96
    %v98 = vmax.f32 %v48, %v49
    %99 = vmax.xlane.f32.xlu0 %v98
    %v100 = vpop.xlane.xlu0 %99
    %v101 = vmax.f32 %v50, %v51
    %102 = vmax.xlane.f32.xlu0 %v101
    %v103 = vpop.xlane.xlu0 %102
    %v104 = vmax.f32 %v52, %v53
    %105 = vmax.xlane.f32.xlu0 %v104
    %v106 = vpop.xlane.xlu0 %105
    %v107 = vmax.f32 %v54, %v55
    %108 = vmax.xlane.f32.xlu0 %v107
    %v109 = vpop.xlane.xlu0 %108
    %v110 = vmax.f32 %v56, %v57
    %111 = vmax.xlane.f32.xlu0 %v110
    %v112 = vpop.xlane.xlu0 %111
    %v113 = vmax.f32 %v58, %v59
    %114 = vmax.xlane.f32.xlu0 %v113
    %v115 = vpop.xlane.xlu0 %114
    %v116 = vmax.f32 %v60, %v61
    %117 = vmax.xlane.f32.xlu0 %v116
    %v118 = vpop.xlane.xlu0 %117
    %v127 = vlaneseq
    %v128 = vand.u32 %v127, 127
    %v129 = vlaneseq
    %v130 = vshrl.u32 %v129, 7
    %v131 = vsub.s32 %v128, %v130
    %v132 = vrot.slane %v87, %v131
    %v133 = vadd.s32 %v128, 4294967288
    %v134 = vlaneseq
    %v135 = vshrl.u32 %v134, 7
    %v136 = vsub.s32 %v133, %v135
    %v137 = vrot.slane %v88, %v136
    %vm138 = vcmask 130112
    %v139 = vsel %vm138, %v137, %v132
    %v140 = vadd.s32 %v128, 4294967280
    %v141 = vlaneseq
    %v142 = vshrl.u32 %v141, 7
    %v143 = vsub.s32 %v140, %v142
    %v144 = vrot.slane %v89, %v143
    %vm145 = vcmask 195712
    %v146 = vsel %vm145, %v144, %v139
    %v147 = vadd.s32 %v128, 4294967272
    %v148 = vlaneseq
    %v149 = vshrl.u32 %v148, 7
    %v150 = vsub.s32 %v147, %v149
    %v151 = vrot.slane %v90, %v150
    %vm152 = vcmask 261312
    %v153 = vsel %vm152, %v151, %v146
    %v154 = vlaneseq
    %v155 = vshrl.u32 %v154, 7
    %v156 = vsub.s32 %v128, %v155
    %v157 = vrot.slane %v91, %v156
    %v158 = vlaneseq
    %v159 = vshrl.u32 %v158, 7
    %v160 = vsub.s32 %v133, %v159
    %v161 = vrot.slane %v92, %v160
    %v162 = vsel %vm138, %v161, %v157
    %v163 = vlaneseq
    %v164 = vshrl.u32 %v163, 7
    %v165 = vsub.s32 %v140, %v164
    %v166 = vrot.slane %v93, %v165
    %v167 = vsel %vm145, %v166, %v162
    %v168 = vlaneseq
    %v169 = vshrl.u32 %v168, 7
    %v170 = vsub.s32 %v147, %v169
    %v171 = vrot.slane %v94, %v170
    %v172 = vsel %vm152, %v171, %v167
    %vm173 = vcmask 1041409
    %v174 = vsel %vm173, %v172, %v153
    %v184 = vlaneseq
    %v185 = vshrl.u32 %v184, 7
    %v186 = vsub.s32 %v128, %v185
    %v187 = vrot.slane %v97, %v186
    %v188 = vlaneseq
    %v189 = vshrl.u32 %v188, 7
    %v190 = vsub.s32 %v133, %v189
    %v191 = vrot.slane %v100, %v190
    %v192 = vsel %vm138, %v191, %v187
    %v193 = vlaneseq
    %v194 = vshrl.u32 %v193, 7
    %v195 = vsub.s32 %v140, %v194
    %v196 = vrot.slane %v103, %v195
    %v197 = vsel %vm145, %v196, %v192
    %v198 = vlaneseq
    %v199 = vshrl.u32 %v198, 7
    %v200 = vsub.s32 %v147, %v199
    %v201 = vrot.slane %v106, %v200
    %v202 = vsel %vm152, %v201, %v197
    %v203 = vlaneseq
    %v204 = vshrl.u32 %v203, 7
    %v205 = vsub.s32 %v128, %v204
    %v206 = vrot.slane %v109, %v205
    %v207 = vlaneseq
    %v208 = vshrl.u32 %v207, 7
    %v209 = vsub.s32 %v133, %v208
    %v210 = vrot.slane %v112, %v209
    %v211 = vsel %vm138, %v210, %v206
    %v212 = vlaneseq
    %v213 = vshrl.u32 %v212, 7
    %v214 = vsub.s32 %v140, %v213
    %v215 = vrot.slane %v115, %v214
    %v216 = vsel %vm145, %v215, %v211
    %v217 = vlaneseq
    %v218 = vshrl.u32 %v217, 7
    %v219 = vsub.s32 %v147, %v218
    %v220 = vrot.slane %v118, %v219
    %v221 = vsel %vm152, %v220, %v216
    %vm222 = vcmask 1043459
    %v223 = vsel %vm222, %v221, %v202
    %vm225 = vcmask 1041408
    %v226 = vsel %vm225, %v174, %v223
    %v227 = vld [vmem:[%s1] sm:$0xff]
    %v228 = vld [vmem:[%s1 + $0x8] sm:$0xff]
    %v229 = vld [vmem:[%s1 + $0x10] sm:$0xff]
    %v230 = vld [vmem:[%s1 + $0x18] sm:$0xff]
    %vm231 = vcmask 261120
    %v233 = vsel %vm231, %v226, 0
    %235 = vmatprep.subr.mxu0 0.0
    %236 = vmatpush1.msra.mxu0 %v227
    %237 = vmatprep.subr.mxu0 0.0
    %238 = vmatpush1.msra.mxu0 %v228
    %239 = vmatprep.subr.mxu0 0.0
    %240 = vmatpush1.msra.mxu0 %v229
    %241 = vmatprep.subr.mxu0 0.0
    %242 = vmatpush1.msra.mxu0 %v230
    %243 = vmatprep.subr.mxu0 0.0
    %244 = vmatpush1.msra.mxu0 0.0
    %245 = vmatprep.subr.mxu0 0.0
    %246 = vmatpush1.msra.mxu0 0.0
    %247 = vmatprep.subr.mxu0 0.0
    %248 = vmatpush1.msra.mxu0 0.0
    %249 = vmatprep.subr.mxu0 0.0
    %250 = vmatpush1.msra.mxu0 0.0
    %251 = vmatprep.subr.mxu0 0.0
    %252 = vmatpush1.msra.mxu0 0.0
    %253 = vmatprep.subr.mxu0 0.0
    %254 = vmatpush1.msra.mxu0 0.0
    %255 = vmatprep.subr.mxu0 0.0
    %256 = vmatpush1.msra.mxu0 0.0
    %257 = vmatprep.subr.mxu0 0.0
    %258 = vmatpush1.msra.mxu0 0.0
    %259 = vmatprep.subr.mxu0 0.0
    %260 = vmatpush1.msra.mxu0 0.0
    %261 = vmatprep.subr.mxu0 0.0
    %262 = vmatpush1.msra.mxu0 0.0
    %263 = vmatprep.subr.mxu0 0.0
    %264 = vmatpush1.msra.mxu0 0.0
    %265 = vmatprep.subr.mxu0 0.0
    %266 = vmatpush1.msra.mxu0 0.0
    %267 = vmatprep.subr.mxu0 0.0
    %268 = vmatpush1.msra.mxu0 0.0
    %269 = vmatprep.subr.mxu0 0.0
    %270 = vmatpush1.msra.mxu0 0.0
    %271 = vmatprep.subr.mxu0 0.0
    %272 = vmatpush1.msra.mxu0 0.0
    %273 = vmatprep.subr.mxu0 0.0
    %274 = vmatpush1.msra.mxu0 0.0
    %275 = vmatprep.subr.mxu0 0.0
    %276 = vmatpush1.msra.mxu0 0.0
    %277 = vmatprep.subr.mxu0 0.0
    %278 = vmatpush1.msra.mxu0 0.0
    %279 = vmatprep.subr.mxu0 0.0
    %280 = vmatpush1.msra.mxu0 0.0
    %281 = vmatprep.subr.mxu0 0.0
    %282 = vmatpush1.msra.mxu0 0.0
    %283 = vmatprep.subr.mxu0 0.0
    %284 = vmatpush1.msra.mxu0 0.0
    %285 = vmatprep.subr.mxu0 0.0
    %286 = vmatpush1.msra.mxu0 0.0
    %287 = vmatprep.subr.mxu0 0.0
    %288 = vmatpush1.msra.mxu0 0.0
    %289 = vmatprep.subr.mxu0 0.0
    %290 = vmatpush1.msra.mxu0 0.0
    %291 = vmatprep.subr.mxu0 0.0
    %292 = vmatpush1.msra.mxu0 0.0
    %293 = vmatprep.subr.mxu0 0.0
    %294 = vmatpush1.msra.mxu0 0.0
    %295 = vmatprep.subr.mxu0 0.0
    %296 = vmatpush1.msra.mxu0 0.0
    %297 = vmatprep.subr.mxu0 0.0
    %298 = vmatpush1.msra.mxu0 0.0
    %299 = vmatprep.mubr.f32.mxu0 0.0
    %300 = vmatmul.mubr.f32.gmra.mrb[0].mxu0 %v233
    %v301 = vpop.f32.mrb[0].mxu0
    %v302 = vadd.f32 0.0, %v301
    %v303 = vpop.f32.mrb[0].mxu0
    %304 = vdwg.mxu0
    %v305 = vmax.f32 %v302, 0.0
    %v306 = vld [vmem:[%s2] sm:$0x3]
    %vm307 = vcmask 15360
    %v309 = vsel %vm307, %v305, 0
    %v312 = vsel %vm225, %v306, 0
    %314 = vmatprep.subr.mxu0 0.0
    %315 = vmatpush1.msra.mxu0 %v312
    %316 = vmatprep.subr.mxu0 0.0
    %317 = vmatpush1.msra.mxu0 0.0
    %318 = vmatprep.subr.mxu0 0.0
    %319 = vmatpush1.msra.mxu0 0.0
    %320 = vmatprep.subr.mxu0 0.0
    %321 = vmatpush1.msra.mxu0 0.0
    %322 = vmatprep.subr.mxu0 0.0
    %323 = vmatpush1.msra.mxu0 0.0
    %324 = vmatprep.subr.mxu0 0.0
    %325 = vmatpush1.msra.mxu0 0.0
    %326 = vmatprep.subr.mxu0 0.0
    %327 = vmatpush1.msra.mxu0 0.0
    %328 = vmatprep.subr.mxu0 0.0
    %329 = vmatpush1.msra.mxu0 0.0
    %330 = vmatprep.subr.mxu0 0.0
    %331 = vmatpush1.msra.mxu0 0.0
    %332 = vmatprep.subr.mxu0 0.0
    %333 = vmatpush1.msra.mxu0 0.0
    %334 = vmatprep.subr.mxu0 0.0
    %335 = vmatpush1.msra.mxu0 0.0
    %336 = vmatprep.subr.mxu0 0.0
    %337 = vmatpush1.msra.mxu0 0.0
    %338 = vmatprep.subr.mxu0 0.0
    %339 = vmatpush1.msra.mxu0 0.0
    %340 = vmatprep.subr.mxu0 0.0
    %341 = vmatpush1.msra.mxu0 0.0
    %342 = vmatprep.subr.mxu0 0.0
    %343 = vmatpush1.msra.mxu0 0.0
    %344 = vmatprep.subr.mxu0 0.0
    %345 = vmatpush1.msra.mxu0 0.0
    %346 = vmatprep.subr.mxu0 0.0
    %347 = vmatpush1.msra.mxu0 0.0
    %348 = vmatprep.subr.mxu0 0.0
    %349 = vmatpush1.msra.mxu0 0.0
    %350 = vmatprep.subr.mxu0 0.0
    %351 = vmatpush1.msra.mxu0 0.0
    %352 = vmatprep.subr.mxu0 0.0
    %353 = vmatpush1.msra.mxu0 0.0
    %354 = vmatprep.subr.mxu0 0.0
    %355 = vmatpush1.msra.mxu0 0.0
    %356 = vmatprep.subr.mxu0 0.0
    %357 = vmatpush1.msra.mxu0 0.0
    %358 = vmatprep.subr.mxu0 0.0
    %359 = vmatpush1.msra.mxu0 0.0
    %360 = vmatprep.subr.mxu0 0.0
    %361 = vmatpush1.msra.mxu0 0.0
    %362 = vmatprep.subr.mxu0 0.0
    %363 = vmatpush1.msra.mxu0 0.0
    %364 = vmatprep.subr.mxu0 0.0
    %365 = vmatpush1.msra.mxu0 0.0
    %366 = vmatprep.subr.mxu0 0.0
    %367 = vmatpush1.msra.mxu0 0.0
    %368 = vmatprep.subr.mxu0 0.0
    %369 = vmatpush1.msra.mxu0 0.0
    %370 = vmatprep.subr.mxu0 0.0
    %371 = vmatpush1.msra.mxu0 0.0
    %372 = vmatprep.subr.mxu0 0.0
    %373 = vmatpush1.msra.mxu0 0.0
    %374 = vmatprep.subr.mxu0 0.0
    %375 = vmatpush1.msra.mxu0 0.0
    %376 = vmatprep.subr.mxu0 0.0
    %377 = vmatpush1.msra.mxu0 0.0
    %378 = vmatprep.mubr.f32.mxu0 0.0
    %379 = vmatmul.mubr.f32.gmra.mrb[0].mxu0 %v309
    %v380 = vpop.f32.mrb[0].mxu0
    %v381 = vadd.f32 0.0, %v380
    %v382 = vpop.f32.mrb[0].mxu0
    %383 = vdwg.mxu0
    %v385 = vrot.slane %v381, 2
    %v387 = vadd.f32 %v381, %v385
    %v388 = vxor.u32 %v387, 2147483648
    %v389 = vmul.f32 %v388, 1.442695
    %v390 = vpow.pop %v389
    %v391 = vadd.f32 %v390, 1.0
    %v392 = vrcp.pop %v391
    %v393 = vmul.f32 1.0, %v392
    %v394 = vlaneseq
    %v395 = vshrl.u32 %v394, 7
    %v396 = vsub.s32 0, %v395
    %v397 = vrot.slane %v393, %v396
    %399 = vbcast.lane.b32.xlu0 %v397, 256
    %v400 = vpop.permute.xlu0 %399
    %s402 = sor.u32 256, 8
    %403 = vbcast.lane.b32.xlu0 %v397, %s402
    %v404 = vpop.permute.xlu0 %403
    %s406 = sor.u32 256, 16
    %407 = vbcast.lane.b32.xlu0 %v397, %s406
    %v408 = vpop.permute.xlu0 %407
    %s410 = sor.u32 256, 24
    %411 = vbcast.lane.b32.xlu0 %v397, %s410
    %v412 = vpop.permute.xlu0 %411
    %v413 = vlaneseq
    %v414 = vshrl.u32 %v413, 7
    %v415 = vsub.s32 1, %v414
    %v416 = vrot.slane %v393, %v415
    %418 = vbcast.lane.b32.xlu0 %v416, 256
    %v419 = vpop.permute.xlu0 %418
    %s421 = sor.u32 256, 8
    %422 = vbcast.lane.b32.xlu0 %v416, %s421
    %v423 = vpop.permute.xlu0 %422
    %s425 = sor.u32 256, 16
    %426 = vbcast.lane.b32.xlu0 %v416, %s425
    %v427 = vpop.permute.xlu0 %426
    %s429 = sor.u32 256, 24
    %430 = vbcast.lane.b32.xlu0 %v416, %s429
    %v431 = vpop.permute.xlu0 %430
    %v432 = vmul.f32 %v46, %v400
    %v433 = vmul.f32 %v47, %v400
    %v434 = vmul.f32 %v48, %v404
    %v435 = vmul.f32 %v49, %v404
    %v436 = vmul.f32 %v50, %v408
    %v437 = vmul.f32 %v51, %v408
    %v438 = vmul.f32 %v52, %v412
    %v439 = vmul.f32 %v53, %v412
    %v440 = vmul.f32 %v54, %v419
    %v441 = vmul.f32 %v55, %v419
    %v442 = vmul.f32 %v56, %v423
    %v443 = vmul.f32 %v57, %v423
    %v444 = vmul.f32 %v58, %v427
    %v445 = vmul.f32 %v59, %v427
    %v446 = vmul.f32 %v60, %v431
    %v447 = vmul.f32 %v61, %v431
    %v448 = vadd.f32 %v432, %v434
    %v449 = vadd.f32 %v448, %v436
    %v450 = vadd.f32 %v449, %v438
    %v451 = vrot.slane %v450, 4
    %v452 = vadd.f32 %v450, %v451
    %v453 = vrot.slane %v452, 2
    %v454 = vadd.f32 %v452, %v453
    %v455 = vrot.slane %v454, 1
    %v456 = vadd.f32 %v454, %v455
    %v457 = vadd.f32 %v433, %v435
    %v458 = vadd.f32 %v457, %v437
    %v459 = vadd.f32 %v458, %v439
    %v460 = vrot.slane %v459, 4
    %v461 = vadd.f32 %v459, %v460
    %v462 = vrot.slane %v461, 2
    %v463 = vadd.f32 %v461, %v462
    %v464 = vrot.slane %v463, 1
    %v465 = vadd.f32 %v463, %v464
    %v466 = vadd.f32 %v440, %v442
    %v467 = vadd.f32 %v466, %v444
    %v468 = vadd.f32 %v467, %v446
    %v469 = vrot.slane %v468, 4
    %v470 = vadd.f32 %v468, %v469
    %v471 = vrot.slane %v470, 2
    %v472 = vadd.f32 %v470, %v471
    %v473 = vrot.slane %v472, 1
    %v474 = vadd.f32 %v472, %v473
    %v475 = vadd.f32 %v441, %v443
    %v476 = vadd.f32 %v475, %v445
    %v477 = vadd.f32 %v476, %v447
    %v478 = vrot.slane %v477, 4
    %v479 = vadd.f32 %v477, %v478
    %v480 = vrot.slane %v479, 2
    %v481 = vadd.f32 %v479, %v480
    %v482 = vrot.slane %v481, 1
    %v483 = vadd.f32 %v481, %v482
    %v484 = vrcp.pop 32.0
    %v485 = vmul.f32 %v456, %v484
    %v486 = vmul.f32 %v465, %v484
    %v487 = vmul.f32 %v474, %v484
    %v488 = vmul.f32 %v483, %v484
    %v489 = vmax.f32 %v432, %v434
    %v490 = vmax.f32 %v489, %v436
    %v491 = vmax.f32 %v490, %v438
    %v492 = vrot.slane %v491, 4
    %v493 = vmax.f32 %v491, %v492
    %v494 = vrot.slane %v493, 2
    %v495 = vmax.f32 %v493, %v494
    %v496 = vrot.slane %v495, 1
    %v497 = vmax.f32 %v495, %v496
    %v498 = vmax.f32 %v433, %v435
    %v499 = vmax.f32 %v498, %v437
    %v500 = vmax.f32 %v499, %v439
    %v501 = vrot.slane %v500, 4
    %v502 = vmax.f32 %v500, %v501
    %v503 = vrot.slane %v502, 2
    %v504 = vmax.f32 %v502, %v503
    %v505 = vrot.slane %v504, 1
    %v506 = vmax.f32 %v504, %v505
    %v507 = vmax.f32 %v440, %v442
    %v508 = vmax.f32 %v507, %v444
    %v509 = vmax.f32 %v508, %v446
    %v510 = vrot.slane %v509, 4
    %v511 = vmax.f32 %v509, %v510
    %v512 = vrot.slane %v511, 2
    %v513 = vmax.f32 %v511, %v512
    %v514 = vrot.slane %v513, 1
    %v515 = vmax.f32 %v513, %v514
    %v516 = vmax.f32 %v441, %v443
    %v517 = vmax.f32 %v516, %v445
    %v518 = vmax.f32 %v517, %v447
    %v519 = vrot.slane %v518, 4
    %v520 = vmax.f32 %v518, %v519
    %v521 = vrot.slane %v520, 2
    %v522 = vmax.f32 %v520, %v521
    %v523 = vrot.slane %v522, 1
    %v524 = vmax.f32 %v522, %v523
    %v529 = vsel %vm173, %v487, %v485
    %v530 = vsel %vm173, %v488, %v486
    %v537 = vsel %vm173, %v515, %v497
    %v538 = vsel %vm173, %v524, %v506
    %v541 = vld [vmem:[#allocation5] sm:$0xff]
    %v542 = vld [vmem:[#allocation5 + $0x8] sm:$0xff]
    %v543 = vld [vmem:[#allocation5 + $0x10] sm:$0xff]
    %v544 = vld [vmem:[#allocation5 + $0x18] sm:$0xff]
    %v545 = vld [vmem:[#allocation5 + $0x20] sm:$0xff]
    %v546 = vld [vmem:[#allocation5 + $0x28] sm:$0xff]
    %v547 = vld [vmem:[#allocation5 + $0x30] sm:$0xff]
    %v548 = vld [vmem:[#allocation5 + $0x38] sm:$0xff]
    %v549 = vld [vmem:[#allocation5 + $0x40] sm:$0xff]
    %v550 = vld [vmem:[#allocation5 + $0x48] sm:$0xff]
    %v551 = vld [vmem:[#allocation5 + $0x50] sm:$0xff]
    %v552 = vld [vmem:[#allocation5 + $0x58] sm:$0xff]
    %v553 = vld [vmem:[#allocation5 + $0x60] sm:$0xff]
    %v554 = vld [vmem:[#allocation5 + $0x68] sm:$0xff]
    %v555 = vld [vmem:[#allocation5 + $0x70] sm:$0xff]
    %v556 = vld [vmem:[#allocation5 + $0x78] sm:$0xff]
    %v557 = vld [vmem:[#allocation5 + $0x80] sm:$0xff]
    %v558 = vld [vmem:[#allocation5 + $0x88] sm:$0xff]
    %v559 = vld [vmem:[#allocation5 + $0x90] sm:$0xff]
    %v560 = vld [vmem:[#allocation5 + $0x98] sm:$0xff]
    %v561 = vld [vmem:[#allocation5 + $0xa0] sm:$0xff]
    %v562 = vld [vmem:[#allocation5 + $0xa8] sm:$0xff]
    %v563 = vld [vmem:[#allocation5 + $0xb0] sm:$0xff]
    %v564 = vld [vmem:[#allocation5 + $0xb8] sm:$0xff]
    %v565 = vld [vmem:[#allocation5 + $0xc0] sm:$0xff]
    %v566 = vld [vmem:[#allocation5 + $0xc8] sm:$0xff]
    %v567 = vld [vmem:[#allocation5 + $0xd0] sm:$0xff]
    %v568 = vld [vmem:[#allocation5 + $0xd8] sm:$0xff]
    %v569 = vld [vmem:[#allocation5 + $0xe0] sm:$0xff]
    %v570 = vld [vmem:[#allocation5 + $0xe8] sm:$0xff]
    %v571 = vld [vmem:[#allocation5 + $0xf0] sm:$0xff]
    %v572 = vld [vmem:[#allocation5 + $0xf8] sm:$0xff]
    %v573 = vld [vmem:[#allocation5 + $0x100] sm:$0xff]
    %v574 = vld [vmem:[#allocation5 + $0x108] sm:$0xff]
    %v575 = vld [vmem:[#allocation5 + $0x110] sm:$0xff]
    %v576 = vld [vmem:[#allocation5 + $0x118] sm:$0xff]
    %v577 = vld [vmem:[#allocation5 + $0x120] sm:$0xff]
    %v578 = vld [vmem:[#allocation5 + $0x128] sm:$0xff]
    %v579 = vld [vmem:[#allocation5 + $0x130] sm:$0xff]
    %v580 = vld [vmem:[#allocation5 + $0x138] sm:$0xff]
    %v581 = vld [vmem:[#allocation5 + $0x140] sm:$0xff]
    %v582 = vld [vmem:[#allocation5 + $0x148] sm:$0xff]
    %v583 = vld [vmem:[#allocation5 + $0x150] sm:$0xff]
    %v584 = vld [vmem:[#allocation5 + $0x158] sm:$0xff]
    %v585 = vld [vmem:[#allocation5 + $0x160] sm:$0xff]
    %v586 = vld [vmem:[#allocation5 + $0x168] sm:$0xff]
    %v587 = vld [vmem:[#allocation5 + $0x170] sm:$0xff]
    %v588 = vld [vmem:[#allocation5 + $0x178] sm:$0xff]
    %v589 = vld [vmem:[#allocation5 + $0x180] sm:$0xff]
    %v590 = vld [vmem:[#allocation5 + $0x188] sm:$0xff]
    %v591 = vld [vmem:[#allocation5 + $0x190] sm:$0xff]
    %v592 = vld [vmem:[#allocation5 + $0x198] sm:$0xff]
    %v593 = vld [vmem:[#allocation5 + $0x1a0] sm:$0xff]
    %v594 = vld [vmem:[#allocation5 + $0x1a8] sm:$0xff]
    %v595 = vld [vmem:[#allocation5 + $0x1b0] sm:$0xff]
    %v596 = vld [vmem:[#allocation5 + $0x1b8] sm:$0xff]
    %v597 = vld [vmem:[#allocation5 + $0x1c0] sm:$0xff]
    %v598 = vld [vmem:[#allocation5 + $0x1c8] sm:$0xff]
    %v599 = vld [vmem:[#allocation5 + $0x1d0] sm:$0xff]
    %v600 = vld [vmem:[#allocation5 + $0x1d8] sm:$0xff]
    %v601 = vld [vmem:[#allocation5 + $0x1e0] sm:$0xff]
    %v602 = vld [vmem:[#allocation5 + $0x1e8] sm:$0xff]
    %v603 = vld [vmem:[#allocation5 + $0x1f0] sm:$0xff]
    %v604 = vld [vmem:[#allocation5 + $0x1f8] sm:$0xff]
    %v605 = vld [vmem:[#allocation5 + $0x200] sm:$0xff]
    %v606 = vld [vmem:[#allocation5 + $0x208] sm:$0xff]
    %v607 = vld [vmem:[#allocation5 + $0x210] sm:$0xff]
    %v608 = vld [vmem:[#allocation5 + $0x218] sm:$0xff]
    %v609 = vld [vmem:[#allocation5 + $0x220] sm:$0xff]
    %v610 = vld [vmem:[#allocation5 + $0x228] sm:$0xff]
    %v611 = vld [vmem:[#allocation5 + $0x230] sm:$0xff]
    %v612 = vld [vmem:[#allocation5 + $0x238] sm:$0xff]
    %v613 = vld [vmem:[#allocation5 + $0x240] sm:$0xff]
    %v614 = vld [vmem:[#allocation5 + $0x248] sm:$0xff]
    %v615 = vld [vmem:[#allocation5 + $0x250] sm:$0xff]
    %v616 = vld [vmem:[#allocation5 + $0x258] sm:$0xff]
    %v617 = vld [vmem:[#allocation5 + $0x260] sm:$0xff]
    %v618 = vld [vmem:[#allocation5 + $0x268] sm:$0xff]
    %v619 = vld [vmem:[#allocation5 + $0x270] sm:$0xff]
    %v620 = vld [vmem:[#allocation5 + $0x278] sm:$0xff]
    %v621 = vld [vmem:[#allocation5 + $0x280] sm:$0xff]
    %v622 = vld [vmem:[#allocation5 + $0x288] sm:$0xff]
    %v623 = vld [vmem:[#allocation5 + $0x290] sm:$0xff]
    %v624 = vld [vmem:[#allocation5 + $0x298] sm:$0xff]
    %v625 = vld [vmem:[#allocation5 + $0x2a0] sm:$0xff]
    %v626 = vld [vmem:[#allocation5 + $0x2a8] sm:$0xff]
    %v627 = vld [vmem:[#allocation5 + $0x2b0] sm:$0xff]
    %v628 = vld [vmem:[#allocation5 + $0x2b8] sm:$0xff]
    %v629 = vld [vmem:[#allocation5 + $0x2c0] sm:$0xff]
    %v630 = vld [vmem:[#allocation5 + $0x2c8] sm:$0xff]
    %v631 = vld [vmem:[#allocation5 + $0x2d0] sm:$0xff]
    %v632 = vld [vmem:[#allocation5 + $0x2d8] sm:$0xff]
    %v633 = vld [vmem:[#allocation5 + $0x2e0] sm:$0xff]
    %v634 = vld [vmem:[#allocation5 + $0x2e8] sm:$0xff]
    %v635 = vld [vmem:[#allocation5 + $0x2f0] sm:$0xff]
    %v636 = vld [vmem:[#allocation5 + $0x2f8] sm:$0xff]
    %v637 = vld [vmem:[#allocation5 + $0x300] sm:$0xff]
    %v638 = vld [vmem:[#allocation5 + $0x308] sm:$0xff]
    %v639 = vld [vmem:[#allocation5 + $0x310] sm:$0xff]
    %v640 = vld [vmem:[#allocation5 + $0x318] sm:$0xff]
    %v641 = vld [vmem:[#allocation5 + $0x320] sm:$0xff]
    %v642 = vld [vmem:[#allocation5 + $0x328] sm:$0xff]
    %v643 = vld [vmem:[#allocation5 + $0x330] sm:$0xff]
    %v644 = vld [vmem:[#allocation5 + $0x338] sm:$0xff]
    %v645 = vld [vmem:[#allocation5 + $0x340] sm:$0xff]
    %v646 = vld [vmem:[#allocation5 + $0x348] sm:$0xff]
    %v647 = vld [vmem:[#allocation5 + $0x350] sm:$0xff]
    %v648 = vld [vmem:[#allocation5 + $0x358] sm:$0xff]
    %v649 = vld [vmem:[#allocation5 + $0x360] sm:$0xff]
    %v650 = vld [vmem:[#allocation5 + $0x368] sm:$0xff]
    %v651 = vld [vmem:[#allocation5 + $0x370] sm:$0xff]
    %v652 = vld [vmem:[#allocation5 + $0x378] sm:$0xff]
    %v653 = vld [vmem:[#allocation5 + $0x380] sm:$0xff]
    %v654 = vld [vmem:[#allocation5 + $0x388] sm:$0xff]
    %v655 = vld [vmem:[#allocation5 + $0x390] sm:$0xff]
    %v656 = vld [vmem:[#allocation5 + $0x398] sm:$0xff]
    %v657 = vld [vmem:[#allocation5 + $0x3a0] sm:$0xff]
    %v658 = vld [vmem:[#allocation5 + $0x3a8] sm:$0xff]
    %v659 = vld [vmem:[#allocation5 + $0x3b0] sm:$0xff]
    %v660 = vld [vmem:[#allocation5 + $0x3b8] sm:$0xff]
    %v661 = vld [vmem:[#allocation5 + $0x3c0] sm:$0xff]
    %v662 = vld [vmem:[#allocation5 + $0x3c8] sm:$0xff]
    %v663 = vld [vmem:[#allocation5 + $0x3d0] sm:$0xff]
    %v664 = vld [vmem:[#allocation5 + $0x3d8] sm:$0xff]
    %v665 = vld [vmem:[#allocation5 + $0x3e0] sm:$0xff]
    %v666 = vld [vmem:[#allocation5 + $0x3e8] sm:$0xff]
    %v667 = vld [vmem:[#allocation5 + $0x3f0] sm:$0xff]
    %v668 = vld [vmem:[#allocation5 + $0x3f8] sm:$0xff]
    %669 = vmatprep.subr.mxu0 %v542
    %670 = vmatpush1.msra.mxu0 %v541
    %671 = vmatprep.subr.mxu0 %v544
    %672 = vmatpush1.msra.mxu0 %v543
    %673 = vmatprep.subr.mxu0 %v546
    %674 = vmatpush1.msra.mxu0 %v545
    %675 = vmatprep.subr.mxu0 %v548
    %676 = vmatpush1.msra.mxu0 %v547
    %677 = vmatprep.subr.mxu0 %v550
    %678 = vmatpush1.msra.mxu0 %v549
    %679 = vmatprep.subr.mxu0 %v552
    %680 = vmatpush1.msra.mxu0 %v551
    %681 = vmatprep.subr.mxu0 %v554
    %682 = vmatpush1.msra.mxu0 %v553
    %683 = vmatprep.subr.mxu0 %v556
    %684 = vmatpush1.msra.mxu0 %v555
    %685 = vmatprep.subr.mxu0 %v558
    %686 = vmatpush1.msra.mxu0 %v557
    %687 = vmatprep.subr.mxu0 %v560
    %688 = vmatpush1.msra.mxu0 %v559
    %689 = vmatprep.subr.mxu0 %v562
    %690 = vmatpush1.msra.mxu0 %v561
    %691 = vmatprep.subr.mxu0 %v564
    %692 = vmatpush1.msra.mxu0 %v563
    %693 = vmatprep.subr.mxu0 %v566
    %694 = vmatpush1.msra.mxu0 %v565
    %695 = vmatprep.subr.mxu0 %v568
    %696 = vmatpush1.msra.mxu0 %v567
    %697 = vmatprep.subr.mxu0 %v570
    %698 = vmatpush1.msra.mxu0 %v569
    %699 = vmatprep.subr.mxu0 %v572
    %700 = vmatpush1.msra.mxu0 %v571
    %701 = vmatprep.subr.mxu0 %v574
    %702 = vmatpush1.msra.mxu0 %v573
    %703 = vmatprep.subr.mxu0 %v576
    %704 = vmatpush1.msra.mxu0 %v575
    %705 = vmatprep.subr.mxu0 %v578
    %706 = vmatpush1.msra.mxu0 %v577
    %707 = vmatprep.subr.mxu0 %v580
    %708 = vmatpush1.msra.mxu0 %v579
    %709 = vmatprep.subr.mxu0 %v582
    %710 = vmatpush1.msra.mxu0 %v581
    %711 = vmatprep.subr.mxu0 %v584
    %712 = vmatpush1.msra.mxu0 %v583
    %713 = vmatprep.subr.mxu0 %v586
    %714 = vmatpush1.msra.mxu0 %v585
    %715 = vmatprep.subr.mxu0 %v588
    %716 = vmatpush1.msra.mxu0 %v587
    %717 = vmatprep.subr.mxu0 %v590
    %718 = vmatpush1.msra.mxu0 %v589
    %719 = vmatprep.subr.mxu0 %v592
    %720 = vmatpush1.msra.mxu0 %v591
    %721 = vmatprep.subr.mxu0 %v594
    %722 = vmatpush1.msra.mxu0 %v593
    %723 = vmatprep.subr.mxu0 %v596
    %724 = vmatpush1.msra.mxu0 %v595
    %725 = vmatprep.subr.mxu0 %v598
    %726 = vmatpush1.msra.mxu0 %v597
    %727 = vmatprep.subr.mxu0 %v600
    %728 = vmatpush1.msra.mxu0 %v599
    %729 = vmatprep.subr.mxu0 %v602
    %730 = vmatpush1.msra.mxu0 %v601
    %731 = vmatprep.subr.mxu0 %v604
    %732 = vmatpush1.msra.mxu0 %v603
    %733 = vmatprep.mubr.f32.mxu0 %v530
    %734 = vmatmul.mubr.f32.gmra.mrb[0].mxu0 %v529
    %v735 = vpop.f32.mrb[0].mxu0
    %v736 = vadd.f32 0.0, %v735
    %v737 = vpop.f32.mrb[0].mxu0
    %v738 = vadd.f32 0.0, %v737
    %739 = vdwg.mxu0
    %740 = vmatprep.subr.mxu0 %v606
    %741 = vmatpush1.msra.mxu0 %v605
    %742 = vmatprep.subr.mxu0 %v608
    %743 = vmatpush1.msra.mxu0 %v607
    %744 = vmatprep.subr.mxu0 %v610
    %745 = vmatpush1.msra.mxu0 %v609
    %746 = vmatprep.subr.mxu0 %v612
    %747 = vmatpush1.msra.mxu0 %v611
    %748 = vmatprep.subr.mxu0 %v614
    %749 = vmatpush1.msra.mxu0 %v613
    %750 = vmatprep.subr.mxu0 %v616
    %751 = vmatpush1.msra.mxu0 %v615
    %752 = vmatprep.subr.mxu0 %v618
    %753 = vmatpush1.msra.mxu0 %v617
    %754 = vmatprep.subr.mxu0 %v620
    %755 = vmatpush1.msra.mxu0 %v619
    %756 = vmatprep.subr.mxu0 %v622
    %757 = vmatpush1.msra.mxu0 %v621
    %758 = vmatprep.subr.mxu0 %v624
    %759 = vmatpush1.msra.mxu0 %v623
    %760 = vmatprep.subr.mxu0 %v626
    %761 = vmatpush1.msra.mxu0 %v625
    %762 = vmatprep.subr.mxu0 %v628
    %763 = vmatpush1.msra.mxu0 %v627
    %764 = vmatprep.subr.mxu0 %v630
    %765 = vmatpush1.msra.mxu0 %v629
    %766 = vmatprep.subr.mxu0 %v632
    %767 = vmatpush1.msra.mxu0 %v631
    %768 = vmatprep.subr.mxu0 %v634
    %769 = vmatpush1.msra.mxu0 %v633
    %770 = vmatprep.subr.mxu0 %v636
    %771 = vmatpush1.msra.mxu0 %v635
    %772 = vmatprep.subr.mxu0 %v638
    %773 = vmatpush1.msra.mxu0 %v637
    %774 = vmatprep.subr.mxu0 %v640
    %775 = vmatpush1.msra.mxu0 %v639
    %776 = vmatprep.subr.mxu0 %v642
    %777 = vmatpush1.msra.mxu0 %v641
    %778 = vmatprep.subr.mxu0 %v644
    %779 = vmatpush1.msra.mxu0 %v643
    %780 = vmatprep.subr.mxu0 %v646
    %781 = vmatpush1.msra.mxu0 %v645
    %782 = vmatprep.subr.mxu0 %v648
    %783 = vmatpush1.msra.mxu0 %v647
    %784 = vmatprep.subr.mxu0 %v650
    %785 = vmatpush1.msra.mxu0 %v649
    %786 = vmatprep.subr.mxu0 %v652
    %787 = vmatpush1.msra.mxu0 %v651
    %788 = vmatprep.subr.mxu0 %v654
    %789 = vmatpush1.msra.mxu0 %v653
    %790 = vmatprep.subr.mxu0 %v656
    %791 = vmatpush1.msra.mxu0 %v655
    %792 = vmatprep.subr.mxu0 %v658
    %793 = vmatpush1.msra.mxu0 %v657
    %794 = vmatprep.subr.mxu0 %v660
    %795 = vmatpush1.msra.mxu0 %v659
    %796 = vmatprep.subr.mxu0 %v662
    %797 = vmatpush1.msra.mxu0 %v661
    %798 = vmatprep.subr.mxu0 %v664
    %799 = vmatpush1.msra.mxu0 %v663
    %800 = vmatprep.subr.mxu0 %v666
    %801 = vmatpush1.msra.mxu0 %v665
    %802 = vmatprep.subr.mxu0 %v668
    %803 = vmatpush1.msra.mxu0 %v667
    %804 = vmatprep.mubr.f32.mxu0 %v538
    %805 = vmatmul.mubr.f32.gmra.mrb[0].mxu0 %v537
    %v806 = vpop.f32.mrb[0].mxu0
    %v807 = vadd.f32 %v736, %v806
    %v808 = vpop.f32.mrb[0].mxu0
    %v809 = vadd.f32 %v738, %v808
    %810 = vdwg.mxu0
    %v811 = vxor.u32 %v807, 2147483648
    %v812 = vxor.u32 %v809, 2147483648
    %v813 = vmul.f32 %v811, 1.442695
    %v814 = vpow.pop %v813
    %v815 = vmul.f32 %v812, 1.442695
    %v816 = vpow.pop %v815
    %v817 = vadd.f32 %v814, 1.0
    %v818 = vadd.f32 %v816, 1.0
    %v819 = vrcp.pop %v817
    %v820 = vmul.f32 1.0, %v819
    %v821 = vrcp.pop %v818
    %v822 = vmul.f32 1.0, %v821
    %v825 = vcombine.low %v820, %v822
    %v827 = vunpack.c.l.s4 1966171168
    %v828 = vunpack.c.0.s8 %v827
    %v829 = vlaneseq
    %v830 = vshrl.u32 %v829, 7
    %v831 = vsub.s32 %v828, %v830
    %v832 = vrot.slane %v825, %v831
    %v833 = vcombine.high %v832, %v832
    %v835 = vunpack.c.l.s4 1966171168
    %v836 = vunpack.c.0.s8 %v835
    %v837 = vlaneseq
    %v838 = vshrl.u32 %v837, 7
    %v839 = vsub.s32 %v836, %v838
    %v840 = vrot.slane %v832, %v839
    %v842 = vunpack.c.l.s4 1966171168
    %v843 = vunpack.c.0.s8 %v842
    %v844 = vlaneseq
    %v845 = vshrl.u32 %v844, 7
    %v846 = vsub.s32 %v843, %v845
    %v847 = vrot.slane %v833, %v846
    %v848 = vlaneseq
    %v849 = vshrl.u32 %v848, 7
    %v850 = vsub.s32 0, %v849
    %v851 = vrot.slane %v840, %v850
    %v852 = vlaneseq
    %v853 = vshrl.u32 %v852, 7
    %v854 = vsub.s32 1, %v853
    %v855 = vrot.slane %v840, %v854
    %v856 = vlaneseq
    %v857 = vshrl.u32 %v856, 7
    %v858 = vsub.s32 0, %v857
    %v859 = vrot.slane %v847, %v858
    %v860 = vlaneseq
    %v861 = vshrl.u32 %v860, 7
    %v862 = vsub.s32 1, %v861
    %v863 = vrot.slane %v847, %v862
    %v868 = vmul.f32 %v432, %v851
    %v869 = vmul.f32 %v433, %v855
    %v870 = vmul.f32 %v434, %v851
    %v871 = vmul.f32 %v435, %v855
    %v872 = vmul.f32 %v436, %v851
    %v873 = vmul.f32 %v437, %v855
    %v874 = vmul.f32 %v438, %v851
    %v875 = vmul.f32 %v439, %v855
    %v876 = vmul.f32 %v440, %v859
    %v877 = vmul.f32 %v441, %v863
    %v878 = vmul.f32 %v442, %v859
    %v879 = vmul.f32 %v443, %v863
    %v880 = vmul.f32 %v444, %v859
    %v881 = vmul.f32 %v445, %v863
    %v882 = vmul.f32 %v446, %v859
    %v883 = vmul.f32 %v447, %v863
    %884 = vst [vmem:[#allocation7] sm:$0xff] %v868
    %885 = vst [vmem:[#allocation7 + $0x8] sm:$0xff] %v869
    %886 = vst [vmem:[#allocation7 + $0x10] sm:$0xff] %v870
    %887 = vst [vmem:[#allocation7 + $0x18] sm:$0xff] %v871
    %888 = vst [vmem:[#allocation7 + $0x20] sm:$0xff] %v872
    %889 = vst [vmem:[#allocation7 + $0x28] sm:$0xff] %v873
    %890 = vst [vmem:[#allocation7 + $0x30] sm:$0xff] %v874
    %891 = vst [vmem:[#allocation7 + $0x38] sm:$0xff] %v875
    %892 = vst [vmem:[#allocation7 + $0x40] sm:$0xff] %v876
    %893 = vst [vmem:[#allocation7 + $0x48] sm:$0xff] %v877
    %894 = vst [vmem:[#allocation7 + $0x50] sm:$0xff] %v878
    %895 = vst [vmem:[#allocation7 + $0x58] sm:$0xff] %v879
    %896 = vst [vmem:[#allocation7 + $0x60] sm:$0xff] %v880
    %897 = vst [vmem:[#allocation7 + $0x68] sm:$0xff] %v881
    %898 = vst [vmem:[#allocation7 + $0x70] sm:$0xff] %v882
    %899 = vst [vmem:[#allocation7 + $0x78] sm:$0xff] %v883
    // Predicated region
    $region26: #{tpu_custom_call.1} parent=1 // pred_check
      _
    $region27: #{tpu_custom_call.1} parent=1 // pred_check_branch
      %901 = sbr.rel (0) target = $region29
    $region28: #{tpu_custom_call.1} parent=1 // pred_region
      %s903 = ssub.s32 2048, 2048
      %904 = vsyncadd [#allocation4], %s903
      %s905 = sshll.u32 [#allocation7], 4
      %s906 = int_to_ptr.vmem [resolvable:$true] %s905
      %911 = dma.vmem_to_hbm [thread:$0]  %s906, 2048, %s4, [#allocation4], 256, 256, 16
    $region29: #{tpu_custom_call.1} parent=1 // pred_fallthru
      _
    // Predicated region
    $region30: #{tpu_custom_call.1} parent=1 // pred_check
      _
    $region31: #{tpu_custom_call.1} parent=1 // pred_check_branch
      %913 = sbr.rel (0) target = $region33
    $region32: #{tpu_custom_call.1} parent=1 // pred_region
      %914 = dma.done [#allocation4], 2048
    $region33: #{tpu_custom_call.1} parent=1 // pred_fallthru
      _
    %915 = vsyncpa [#allocation3], 1
    %916 = vsyncpa [#allocation6], 1
    %917 = vsyncpa [#allocation4], 1

// kernel: tpu_custom_call.1
$region0: #{tpu_custom_call.1}
  #allocation0 [shape = 'u32[]', space=smem, size = 0x4, offset = 0x4, fixed_abs, tag = 'smem constant byte address 0x4 - core index']
  #allocation1 [shape = 'u32[144,128]{1,0:T(1,128)}', space=vmem, size = 0x12000, scoped, tag = 'internal scratch']
  %s0 = inlined_call_operand.hbm [shape: f32[2,32,256], index: 0, kind: input, shape index: {}]
  %s1 = inlined_call_operand.vmem [shape: f32[32,2], index: 1, kind: input, shape index: {}]
  %s2 = inlined_call_operand.vmem [shape: f32[2,32], index: 2, kind: input, shape index: {}]
  %s3 = inlined_call_operand.hbm [shape: f32[512,256], index: 3, kind: input, shape index: {}]
  %s4 = inlined_call_operand.hbm [shape: f32[2,32,256], index: 4, kind: output, shape index: {}]
  %s5 = sld [smem:[#allocation0]]
  $region34: #{tpu_custom_call.1} parent=0
    _
  %s7 = ssub.s32 1, %s5
  %s8 = scalar_select 0, %s7, %s5
  $region1: #{tpu_custom_call.1} parent=0
    #allocation2 [shape = 'u8[65536]{0}', space=vmem, size = 0x10000, scoped, tag = 'input window, operand 0, single buffered']
    #allocation3 [shape = 's32[1]{0}', space=sflag, size = 0x4, scoped, tag = 'scoped memory for tpu_custom_call.1']
    #allocation4 [shape = 's32[1]{0}', space=sflag, size = 0x4, scoped, tag = 'scoped memory for tpu_custom_call.1']
    #allocation5 [shape = 'u8[524288]{0}', space=vmem, size = 0x80000, scoped, tag = 'input window, operand 3, single buffered']
    #allocation6 [shape = 's32[1]{0}', space=sflag, size = 0x4, scoped, tag = 'scoped memory for tpu_custom_call.1']
    #allocation7 [shape = 'u8[65536]{0}', space=vmem, size = 0x10000, scoped, tag = 'output window, operand 0, single buffered']
    %9 = vsyncpa [#allocation3], 0
    %10 = vsyncpa [#allocation6], 0
    %11 = vsyncpa [#allocation4], 0
    // Predicated region
    $region2: #{tpu_custom_call.1} parent=1 // pred_check
      _
    $region3: #{tpu_custom_call.1} parent=1 // pred_check_branch
      %13 = sbr.rel (0) target = $region5
    $region4: #{tpu_custom_call.1} parent=1 // pred_region
      %s15 = ssub.s32 2048, 2048
      %16 = vsyncadd [#allocation3], %s15
      %s17 = sshll.u32 [#allocation2], 4
      %s18 = int_to_ptr.vmem [resolvable:$true] %s17
      %23 = dma.hbm_to_vmem [thread:$0]  %s0, 2048, %s18, [#allocation3], 256, 256, 16
    $region5: #{tpu_custom_call.1} parent=1 // pred_fallthru
      _
    // Predicated region
    $region6: #{tpu_custom_call.1} parent=1 // pred_check
      _
    $region7: #{tpu_custom_call.1} parent=1 // pred_check_branch
      %25 = sbr.rel (0) target = $region9
    $region8: #{tpu_custom_call.1} parent=1 // pred_region
      _
    $region9: #{tpu_custom_call.1} parent=1 // pred_fallthru
      _
    // Predicated region
    $region10: #{tpu_custom_call.1} parent=1 // pred_check
      _
    $region11: #{tpu_custom_call.1} parent=1 // pred_check_branch
      %27 = sbr.rel (0) target = $region13
    $region12: #{tpu_custom_call.1} parent=1 // pred_region
      _
    $region13: #{tpu_custom_call.1} parent=1 // pred_fallthru
      _
    // Predicated region
    $region14: #{tpu_custom_call.1} parent=1 // pred_check
      _
    $region15: #{tpu_custom_call.1} parent=1 // pred_check_branch
      %29 = sbr.rel (0) target = $region17
    $region16: #{tpu_custom_call.1} parent=1 // pred_region
      %s31 = ssub.s32 16384, 16384
      %32 = vsyncadd [#allocation6], %s31
      %s33 = sshll.u32 [#allocation5], 4
      %s34 = int_to_ptr.vmem [resolvable:$true] %s33
      %39 = dma.hbm_to_vmem [thread:$0]  %s3, 16384, %s34, [#allocation6], 256, 256, 16
    $region17: #{tpu_custom_call.1} parent=1 // pred_fallthru
      _
    // Predicated region
    $region18: #{tpu_custom_call.1} parent=1 // pred_check
      _
    $region19: #{tpu_custom_call.1} parent=1 // pred_check_branch
      %41 = sbr.rel (0) target = $region21
    $region20: #{tpu_custom_call.1} parent=1 // pred_region
      %42 = dma.done [#allocation3], 2048
    $region21: #{tpu_custom_call.1} parent=1 // pred_fallthru
      _
    // Predicated region
    $region22: #{tpu_custom_call.1} parent=1 // pred_check
      _
    $region23: #{tpu_custom_call.1} parent=1 // pred_check_branch
      %44 = sbr.rel (0) target = $region25
    $region24: #{tpu_custom_call.1} parent=1 // pred_region
      %45 = dma.done [#allocation6], 16384
    $region25: #{tpu_custom_call.1} parent=1 // pred_fallthru
      _
    %v46 = vld [vmem:[#allocation2] sm:$0xff]
    %v47 = vld [vmem:[#allocation2 + $0x8] sm:$0xff]
    %v48 = vld [vmem:[#allocation2 + $0x10] sm:$0xff]
    %v49 = vld [vmem:[#allocation2 + $0x18] sm:$0xff]
    %v50 = vld [vmem:[#allocation2 + $0x20] sm:$0xff]
    %v51 = vld [vmem:[#allocation2 + $0x28] sm:$0xff]
    %v52 = vld [vmem:[#allocation2 + $0x30] sm:$0xff]
    %v53 = vld [vmem:[#allocation2 + $0x38] sm:$0xff]
    %v54 = vld [vmem:[#allocation2 + $0x40] sm:$0xff]
    %v55 = vld [vmem:[#allocation2 + $0x48] sm:$0xff]
    %v56 = vld [vmem:[#allocation2 + $0x50] sm:$0xff]
    %v57 = vld [vmem:[#allocation2 + $0x58] sm:$0xff]
    %v58 = vld [vmem:[#allocation2 + $0x60] sm:$0xff]
    %v59 = vld [vmem:[#allocation2 + $0x68] sm:$0xff]
    %v60 = vld [vmem:[#allocation2 + $0x70] sm:$0xff]
    %v61 = vld [vmem:[#allocation2 + $0x78] sm:$0xff]
    %v62 = vadd.f32 %v46, %v47
    %63 = vadd.xlane.f32.xlu0 %v62
    %v64 = vpop.xlane.xlu0 %63
    %v65 = vadd.f32 %v48, %v49
    %66 = vadd.xlane.f32.xlu0 %v65
    %v67 = vpop.xlane.xlu0 %66
    %v68 = vadd.f32 %v50, %v51
    %69 = vadd.xlane.f32.xlu0 %v68
    %v70 = vpop.xlane.xlu0 %69
    %v71 = vadd.f32 %v52, %v53
    %72 = vadd.xlane.f32.xlu0 %v71
    %v73 = vpop.xlane.xlu0 %72
    %v74 = vadd.f32 %v54, %v55
    %75 = vadd.xlane.f32.xlu0 %v74
    %v76 = vpop.xlane.xlu0 %75
    %v77 = vadd.f32 %v56, %v57
    %78 = vadd.xlane.f32.xlu0 %v77
    %v79 = vpop.xlane.xlu0 %78
    %v80 = vadd.f32 %v58, %v59
    %81 = vadd.xlane.f32.xlu0 %v80
    %v82 = vpop.xlane.xlu0 %81
    %v83 = vadd.f32 %v60, %v61
    %84 = vadd.xlane.f32.xlu0 %v83
    %v85 = vpop.xlane.xlu0 %84
    %v86 = vrcp.pop 256.0
    %v87 = vmul.f32 %v64, %v86
    %v88 = vmul.f32 %v67, %v86
    %v89 = vmul.f32 %v70, %v86
    %v90 = vmul.f32 %v73, %v86
    %v91 = vmul.f32 %v76, %v86
    %v92 = vmul.f32 %v79, %v86
    %v93 = vmul.f32 %v82, %v86
    %v94 = vmul.f32 %v85, %v86
    %v95 = vmax.f32 %v46, %v47
    %96 = vmax.xlane.f32.xlu0 %v95
    %v97 = vpop.xlane.xlu0 %96
    %v98 = vmax.f32 %v48, %v49
    %99 = vmax.xlane.f32.xlu0 %v98
    %v100 = vpop.xlane.xlu0 %99
    %v101 = vmax.f32 %v50, %v51
    %102 = vmax.xlane.f32.xlu0 %v101
    %v103 = vpop.xlane.xlu0 %102
    %v104 = vmax.f32 %v52, %v53
    %105 = vmax.xlane.f32.xlu0 %v104
    %v106 = vpop.xlane.xlu0 %105
    %v107 = vmax.f32 %v54, %v55
    %108 = vmax.xlane.f32.xlu0 %v107
    %v109 = vpop.xlane.xlu0 %108
    %v110 = vmax.f32 %v56, %v57
    %111 = vmax.xlane.f32.xlu0 %v110
    %v112 = vpop.xlane.xlu0 %111
    %v113 = vmax.f32 %v58, %v59
    %114 = vmax.xlane.f32.xlu0 %v113
    %v115 = vpop.xlane.xlu0 %114
    %v116 = vmax.f32 %v60, %v61
    %117 = vmax.xlane.f32.xlu0 %v116
    %v118 = vpop.xlane.xlu0 %117
    %v127 = vlaneseq
    %v128 = vand.u32 %v127, 127
    %v129 = vlaneseq
    %v130 = vshrl.u32 %v129, 7
    %v131 = vsub.s32 %v128, %v130
    %v132 = vrot.slane %v87, %v131
    %v133 = vadd.s32 %v128, 4294967288
    %v134 = vlaneseq
    %v135 = vshrl.u32 %v134, 7
    %v136 = vsub.s32 %v133, %v135
    %v137 = vrot.slane %v88, %v136
    %vm138 = vcmask 130112
    %v139 = vsel %vm138, %v137, %v132
    %v140 = vadd.s32 %v128, 4294967280
    %v141 = vlaneseq
    %v142 = vshrl.u32 %v141, 7
    %v143 = vsub.s32 %v140, %v142
    %v144 = vrot.slane %v89, %v143
    %vm145 = vcmask 195712
    %v146 = vsel %vm145, %v144, %v139
    %v147 = vadd.s32 %v128, 4294967272
    %v148 = vlaneseq
    %v149 = vshrl.u32 %v148, 7
    %v150 = vsub.s32 %v147, %v149
    %v151 = vrot.slane %v90, %v150
    %vm152 = vcmask 261312
    %v153 = vsel %vm152, %v151, %v146
    %v154 = vlaneseq
    %v155 = vshrl.u32 %v154, 7
    %v156 = vsub.s32 %v128, %v155
    %v157 = vrot.slane %v91, %v156
    %v158 = vlaneseq
    %v159 = vshrl.u32 %v158, 7
    %v160 = vsub.s32 %v133, %v159
    %v161 = vrot.slane %v92, %v160
    %v162 = vsel %vm138, %v161, %v157
    %v163 = vlaneseq
    %v164 = vshrl.u32 %v163, 7
    %v165 = vsub.s32 %v140, %v164
    %v166 = vrot.slane %v93, %v165
    %v167 = vsel %vm145, %v166, %v162
    %v168 = vlaneseq
    %v169 = vshrl.u32 %v168, 7
    %v170 = vsub.s32 %v147, %v169
    %v171 = vrot.slane %v94, %v170
    %v172 = vsel %vm152, %v171, %v167
    %vm173 = vcmask 1041409
    %v174 = vsel %vm173, %v172, %v153
    %v184 = vlaneseq
    %v185 = vshrl.u32 %v184, 7
    %v186 = vsub.s32 %v128, %v185
    %v187 = vrot.slane %v97, %v186
    %v188 = vlaneseq
    %v189 = vshrl.u32 %v188, 7
    %v190 = vsub.s32 %v133, %v189
    %v191 = vrot.slane %v100, %v190
    %v192 = vsel %vm138, %v191, %v187
    %v193 = vlaneseq
    %v194 = vshrl.u32 %v193, 7
    %v195 = vsub.s32 %v140, %v194
    %v196 = vrot.slane %v103, %v195
    %v197 = vsel %vm145, %v196, %v192
    %v198 = vlaneseq
    %v199 = vshrl.u32 %v198, 7
    %v200 = vsub.s32 %v147, %v199
    %v201 = vrot.slane %v106, %v200
    %v202 = vsel %vm152, %v201, %v197
    %v203 = vlaneseq
    %v204 = vshrl.u32 %v203, 7
    %v205 = vsub.s32 %v128, %v204
    %v206 = vrot.slane %v109, %v205
    %v207 = vlaneseq
    %v208 = vshrl.u32 %v207, 7
    %v209 = vsub.s32 %v133, %v208
    %v210 = vrot.slane %v112, %v209
    %v211 = vsel %vm138, %v210, %v206
    %v212 = vlaneseq
    %v213 = vshrl.u32 %v212, 7
    %v214 = vsub.s32 %v140, %v213
    %v215 = vrot.slane %v115, %v214
    %v216 = vsel %vm145, %v215, %v211
    %v217 = vlaneseq
    %v218 = vshrl.u32 %v217, 7
    %v219 = vsub.s32 %v147, %v218
    %v220 = vrot.slane %v118, %v219
    %v221 = vsel %vm152, %v220, %v216
    %vm222 = vcmask 1043459
    %v223 = vsel %vm222, %v221, %v202
    %vm225 = vcmask 1041408
    %v226 = vsel %vm225, %v174, %v223
    %v227 = vld [vmem:[%s1] sm:$0xff]
    %v228 = vld [vmem:[%s1 + $0x8] sm:$0xff]
    %v229 = vld [vmem:[%s1 + $0x10] sm:$0xff]
    %v230 = vld [vmem:[%s1 + $0x18] sm:$0xff]
    %vm231 = vcmask 261120
    %v233 = vsel %vm231, %v226, 0
    %235 = vmatprep.subr.mxu0 0.0
    %236 = vmatpush1.msra.mxu0 %v227
    %237 = vmatprep.subr.mxu0 0.0
    %238 = vmatpush1.msra.mxu0 %v228
    %239 = vmatprep.subr.mxu0 0.0
    %240 = vmatpush1.msra.mxu0 %v229
    %241 = vmatprep.subr.mxu0 0.0
    %242 = vmatpush1.msra.mxu0 %v230
    %243 = vmatprep.subr.mxu0 0.0
    %244 = vmatpush1.msra.mxu0 0.0
    %245 = vmatprep.subr.mxu0 0.0
    %246 = vmatpush1.msra.mxu0 0.0
    %247 = vmatprep.subr.mxu0 0.0
    %248 = vmatpush1.msra.mxu0 0.0
    %249 = vmatprep.subr.mxu0 0.0
    %250 = vmatpush1.msra.mxu0 0.0
    %251 = vmatprep.subr.mxu0 0.0
    %252 = vmatpush1.msra.mxu0 0.0
    %253 = vmatprep.subr.mxu0 0.0
    %254 = vmatpush1.msra.mxu0 0.0
    %255 = vmatprep.subr.mxu0 0.0
    %256 = vmatpush1.msra.mxu0 0.0
    %257 = vmatprep.subr.mxu0 0.0
    %258 = vmatpush1.msra.mxu0 0.0
    %259 = vmatprep.subr.mxu0 0.0
    %260 = vmatpush1.msra.mxu0 0.0
    %261 = vmatprep.subr.mxu0 0.0
    %262 = vmatpush1.msra.mxu0 0.0
    %263 = vmatprep.subr.mxu0 0.0
    %264 = vmatpush1.msra.mxu0 0.0
    %265 = vmatprep.subr.mxu0 0.0
    %266 = vmatpush1.msra.mxu0 0.0
    %267 = vmatprep.subr.mxu0 0.0
    %268 = vmatpush1.msra.mxu0 0.0
    %269 = vmatprep.subr.mxu0 0.0
    %270 = vmatpush1.msra.mxu0 0.0
    %271 = vmatprep.subr.mxu0 0.0
    %272 = vmatpush1.msra.mxu0 0.0
    %273 = vmatprep.subr.mxu0 0.0
    %274 = vmatpush1.msra.mxu0 0.0
    %275 = vmatprep.subr.mxu0 0.0
    %276 = vmatpush1.msra.mxu0 0.0
    %277 = vmatprep.subr.mxu0 0.0
    %278 = vmatpush1.msra.mxu0 0.0
    %279 = vmatprep.subr.mxu0 0.0
    %280 = vmatpush1.msra.mxu0 0.0
    %281 = vmatprep.subr.mxu0 0.0
    %282 = vmatpush1.msra.mxu0 0.0
    %283 = vmatprep.subr.mxu0 0.0
    %284 = vmatpush1.msra.mxu0 0.0
    %285 = vmatprep.subr.mxu0 0.0
    %286 = vmatpush1.msra.mxu0 0.0
    %287 = vmatprep.subr.mxu0 0.0
    %288 = vmatpush1.msra.mxu0 0.0
    %289 = vmatprep.subr.mxu0 0.0
    %290 = vmatpush1.msra.mxu0 0.0
    %291 = vmatprep.subr.mxu0 0.0
    %292 = vmatpush1.msra.mxu0 0.0
    %293 = vmatprep.subr.mxu0 0.0
    %294 = vmatpush1.msra.mxu0 0.0
    %295 = vmatprep.subr.mxu0 0.0
    %296 = vmatpush1.msra.mxu0 0.0
    %297 = vmatprep.subr.mxu0 0.0
    %298 = vmatpush1.msra.mxu0 0.0
    %299 = vmatprep.mubr.f32.mxu0 0.0
    %300 = vmatmul.mubr.f32.gmra.mrb[0].mxu0 %v233
    %v301 = vpop.f32.mrb[0].mxu0
    %v302 = vadd.f32 0.0, %v301
    %v303 = vpop.f32.mrb[0].mxu0
    %304 = vdwg.mxu0
    %v305 = vmax.f32 %v302, 0.0
    %v306 = vld [vmem:[%s2] sm:$0x3]
    %vm307 = vcmask 15360
    %v309 = vsel %vm307, %v305, 0
    %v312 = vsel %vm225, %v306, 0
    %314 = vmatprep.subr.mxu0 0.0
    %315 = vmatpush1.msra.mxu0 %v312
    %316 = vmatprep.subr.mxu0 0.0
    %317 = vmatpush1.msra.mxu0 0.0
    %318 = vmatprep.subr.mxu0 0.0
    %319 = vmatpush1.msra.mxu0 0.0
    %320 = vmatprep.subr.mxu0 0.0
    %321 = vmatpush1.msra.mxu0 0.0
    %322 = vmatprep.subr.mxu0 0.0
    %323 = vmatpush1.msra.mxu0 0.0
    %324 = vmatprep.subr.mxu0 0.0
    %325 = vmatpush1.msra.mxu0 0.0
    %326 = vmatprep.subr.mxu0 0.0
    %327 = vmatpush1.msra.mxu0 0.0
    %328 = vmatprep.subr.mxu0 0.0
    %329 = vmatpush1.msra.mxu0 0.0
    %330 = vmatprep.subr.mxu0 0.0
    %331 = vmatpush1.msra.mxu0 0.0
    %332 = vmatprep.subr.mxu0 0.0
    %333 = vmatpush1.msra.mxu0 0.0
    %334 = vmatprep.subr.mxu0 0.0
    %335 = vmatpush1.msra.mxu0 0.0
    %336 = vmatprep.subr.mxu0 0.0
    %337 = vmatpush1.msra.mxu0 0.0
    %338 = vmatprep.subr.mxu0 0.0
    %339 = vmatpush1.msra.mxu0 0.0
    %340 = vmatprep.subr.mxu0 0.0
    %341 = vmatpush1.msra.mxu0 0.0
    %342 = vmatprep.subr.mxu0 0.0
    %343 = vmatpush1.msra.mxu0 0.0
    %344 = vmatprep.subr.mxu0 0.0
    %345 = vmatpush1.msra.mxu0 0.0
    %346 = vmatprep.subr.mxu0 0.0
    %347 = vmatpush1.msra.mxu0 0.0
    %348 = vmatprep.subr.mxu0 0.0
    %349 = vmatpush1.msra.mxu0 0.0
    %350 = vmatprep.subr.mxu0 0.0
    %351 = vmatpush1.msra.mxu0 0.0
    %352 = vmatprep.subr.mxu0 0.0
    %353 = vmatpush1.msra.mxu0 0.0
    %354 = vmatprep.subr.mxu0 0.0
    %355 = vmatpush1.msra.mxu0 0.0
    %356 = vmatprep.subr.mxu0 0.0
    %357 = vmatpush1.msra.mxu0 0.0
    %358 = vmatprep.subr.mxu0 0.0
    %359 = vmatpush1.msra.mxu0 0.0
    %360 = vmatprep.subr.mxu0 0.0
    %361 = vmatpush1.msra.mxu0 0.0
    %362 = vmatprep.subr.mxu0 0.0
    %363 = vmatpush1.msra.mxu0 0.0
    %364 = vmatprep.subr.mxu0 0.0
    %365 = vmatpush1.msra.mxu0 0.0
    %366 = vmatprep.subr.mxu0 0.0
    %367 = vmatpush1.msra.mxu0 0.0
    %368 = vmatprep.subr.mxu0 0.0
    %369 = vmatpush1.msra.mxu0 0.0
    %370 = vmatprep.subr.mxu0 0.0
    %371 = vmatpush1.msra.mxu0 0.0
    %372 = vmatprep.subr.mxu0 0.0
    %373 = vmatpush1.msra.mxu0 0.0
    %374 = vmatprep.subr.mxu0 0.0
    %375 = vmatpush1.msra.mxu0 0.0
    %376 = vmatprep.subr.mxu0 0.0
    %377 = vmatpush1.msra.mxu0 0.0
    %378 = vmatprep.mubr.f32.mxu0 0.0
    %379 = vmatmul.mubr.f32.gmra.mrb[0].mxu0 %v309
    %v380 = vpop.f32.mrb[0].mxu0
    %v381 = vadd.f32 0.0, %v380
    %v382 = vpop.f32.mrb[0].mxu0
    %383 = vdwg.mxu0
    %v385 = vrot.slane %v381, 2
    %v387 = vadd.f32 %v381, %v385
    %v388 = vxor.u32 %v387, 2147483648
    %v389 = vmul.f32 %v388, 1.442695
    %v390 = vpow.pop %v389
    %v391 = vadd.f32 %v390, 1.0
    %v392 = vrcp.pop %v391
    %v393 = vmul.f32 1.0, %v392
    %v394 = vlaneseq
    %v395 = vshrl.u32 %v394, 7
    %v396 = vsub.s32 0, %v395
    %v397 = vrot.slane %v393, %v396
    %399 = vbcast.lane.b32.xlu0 %v397, 256
    %v400 = vpop.permute.xlu0 %399
    %s402 = sor.u32 256, 8
    %403 = vbcast.lane.b32.xlu0 %v397, %s402
    %v404 = vpop.permute.xlu0 %403
    %s406 = sor.u32 256, 16
    %407 = vbcast.lane.b32.xlu0 %v397, %s406
    %v408 = vpop.permute.xlu0 %407
    %s410 = sor.u32 256, 24
    %411 = vbcast.lane.b32.xlu0 %v397, %s410
    %v412 = vpop.permute.xlu0 %411
    %v413 = vlaneseq
    %v414 = vshrl.u32 %v413, 7
    %v415 = vsub.s32 1, %v414
    %v416 = vrot.slane %v393, %v415
    %418 = vbcast.lane.b32.xlu0 %v416, 256
    %v419 = vpop.permute.xlu0 %418
    %s421 = sor.u32 256, 8
    %422 = vbcast.lane.b32.xlu0 %v416, %s421
    %v423 = vpop.permute.xlu0 %422
    %s425 = sor.u32 256, 16
    %426 = vbcast.lane.b32.xlu0 %v416, %s425
    %v427 = vpop.permute.xlu0 %426
    %s429 = sor.u32 256, 24
    %430 = vbcast.lane.b32.xlu0 %v416, %s429
    %v431 = vpop.permute.xlu0 %430
    %v432 = vmul.f32 %v46, %v400
    %v433 = vmul.f32 %v47, %v400
    %v434 = vmul.f32 %v48, %v404
    %v435 = vmul.f32 %v49, %v404
    %v436 = vmul.f32 %v50, %v408
    %v437 = vmul.f32 %v51, %v408
    %v438 = vmul.f32 %v52, %v412
    %v439 = vmul.f32 %v53, %v412
    %v440 = vmul.f32 %v54, %v419
    %v441 = vmul.f32 %v55, %v419
    %v442 = vmul.f32 %v56, %v423
    %v443 = vmul.f32 %v57, %v423
    %v444 = vmul.f32 %v58, %v427
    %v445 = vmul.f32 %v59, %v427
    %v446 = vmul.f32 %v60, %v431
    %v447 = vmul.f32 %v61, %v431
    %v448 = vadd.f32 %v432, %v434
    %v449 = vadd.f32 %v448, %v436
    %v450 = vadd.f32 %v449, %v438
    %v451 = vrot.slane %v450, 4
    %v452 = vadd.f32 %v450, %v451
    %v453 = vrot.slane %v452, 2
    %v454 = vadd.f32 %v452, %v453
    %v455 = vrot.slane %v454, 1
    %v456 = vadd.f32 %v454, %v455
    %v457 = vadd.f32 %v433, %v435
    %v458 = vadd.f32 %v457, %v437
    %v459 = vadd.f32 %v458, %v439
    %v460 = vrot.slane %v459, 4
    %v461 = vadd.f32 %v459, %v460
    %v462 = vrot.slane %v461, 2
    %v463 = vadd.f32 %v461, %v462
    %v464 = vrot.slane %v463, 1
    %v465 = vadd.f32 %v463, %v464
    %v466 = vadd.f32 %v440, %v442
    %v467 = vadd.f32 %v466, %v444
    %v468 = vadd.f32 %v467, %v446
    %v469 = vrot.slane %v468, 4
    %v470 = vadd.f32 %v468, %v469
    %v471 = vrot.slane %v470, 2
    %v472 = vadd.f32 %v470, %v471
    %v473 = vrot.slane %v472, 1
    %v474 = vadd.f32 %v472, %v473
    %v475 = vadd.f32 %v441, %v443
    %v476 = vadd.f32 %v475, %v445
    %v477 = vadd.f32 %v476, %v447
    %v478 = vrot.slane %v477, 4
    %v479 = vadd.f32 %v477, %v478
    %v480 = vrot.slane %v479, 2
    %v481 = vadd.f32 %v479, %v480
    %v482 = vrot.slane %v481, 1
    %v483 = vadd.f32 %v481, %v482
    %v484 = vrcp.pop 32.0
    %v485 = vmul.f32 %v456, %v484
    %v486 = vmul.f32 %v465, %v484
    %v487 = vmul.f32 %v474, %v484
    %v488 = vmul.f32 %v483, %v484
    %v489 = vmax.f32 %v432, %v434
    %v490 = vmax.f32 %v489, %v436
    %v491 = vmax.f32 %v490, %v438
    %v492 = vrot.slane %v491, 4
    %v493 = vmax.f32 %v491, %v492
    %v494 = vrot.slane %v493, 2
    %v495 = vmax.f32 %v493, %v494
    %v496 = vrot.slane %v495, 1
    %v497 = vmax.f32 %v495, %v496
    %v498 = vmax.f32 %v433, %v435
    %v499 = vmax.f32 %v498, %v437
    %v500 = vmax.f32 %v499, %v439
    %v501 = vrot.slane %v500, 4
    %v502 = vmax.f32 %v500, %v501
    %v503 = vrot.slane %v502, 2
    %v504 = vmax.f32 %v502, %v503
    %v505 = vrot.slane %v504, 1
    %v506 = vmax.f32 %v504, %v505
    %v507 = vmax.f32 %v440, %v442
    %v508 = vmax.f32 %v507, %v444
    %v509 = vmax.f32 %v508, %v446
    %v510 = vrot.slane %v509, 4
    %v511 = vmax.f32 %v509, %v510
    %v512 = vrot.slane %v511, 2
    %v513 = vmax.f32 %v511, %v512
    %v514 = vrot.slane %v513, 1
    %v515 = vmax.f32 %v513, %v514
    %v516 = vmax.f32 %v441, %v443
    %v517 = vmax.f32 %v516, %v445
    %v518 = vmax.f32 %v517, %v447
    %v519 = vrot.slane %v518, 4
    %v520 = vmax.f32 %v518, %v519
    %v521 = vrot.slane %v520, 2
    %v522 = vmax.f32 %v520, %v521
    %v523 = vrot.slane %v522, 1
    %v524 = vmax.f32 %v522, %v523
    %v529 = vsel %vm173, %v487, %v485
    %v530 = vsel %vm173, %v488, %v486
    %v537 = vsel %vm173, %v515, %v497
    %v538 = vsel %vm173, %v524, %v506
    %v541 = vld [vmem:[#allocation5] sm:$0xff]
    %v542 = vld [vmem:[#allocation5 + $0x8] sm:$0xff]
    %v543 = vld [vmem:[#allocation5 + $0x10] sm:$0xff]
    %v544 = vld [vmem:[#allocation5 + $0x18] sm:$0xff]
    %v545 = vld [vmem:[#allocation5 + $0x20] sm:$0xff]
    %v546 = vld [vmem:[#allocation5 + $0x28] sm:$0xff]
    %v547 = vld [vmem:[#allocation5 + $0x30] sm:$0xff]
    %v548 = vld [vmem:[#allocation5 + $0x38] sm:$0xff]
    %v549 = vld [vmem:[#allocation5 + $0x40] sm:$0xff]
    %v550 = vld [vmem:[#allocation5 + $0x48] sm:$0xff]
    %v551 = vld [vmem:[#allocation5 + $0x50] sm:$0xff]
    %v552 = vld [vmem:[#allocation5 + $0x58] sm:$0xff]
    %v553 = vld [vmem:[#allocation5 + $0x60] sm:$0xff]
    %v554 = vld [vmem:[#allocation5 + $0x68] sm:$0xff]
    %v555 = vld [vmem:[#allocation5 + $0x70] sm:$0xff]
    %v556 = vld [vmem:[#allocation5 + $0x78] sm:$0xff]
    %v557 = vld [vmem:[#allocation5 + $0x80] sm:$0xff]
    %v558 = vld [vmem:[#allocation5 + $0x88] sm:$0xff]
    %v559 = vld [vmem:[#allocation5 + $0x90] sm:$0xff]
    %v560 = vld [vmem:[#allocation5 + $0x98] sm:$0xff]
    %v561 = vld [vmem:[#allocation5 + $0xa0] sm:$0xff]
    %v562 = vld [vmem:[#allocation5 + $0xa8] sm:$0xff]
    %v563 = vld [vmem:[#allocation5 + $0xb0] sm:$0xff]
    %v564 = vld [vmem:[#allocation5 + $0xb8] sm:$0xff]
    %v565 = vld [vmem:[#allocation5 + $0xc0] sm:$0xff]
    %v566 = vld [vmem:[#allocation5 + $0xc8] sm:$0xff]
    %v567 = vld [vmem:[#allocation5 + $0xd0] sm:$0xff]
    %v568 = vld [vmem:[#allocation5 + $0xd8] sm:$0xff]
    %v569 = vld [vmem:[#allocation5 + $0xe0] sm:$0xff]
    %v570 = vld [vmem:[#allocation5 + $0xe8] sm:$0xff]
    %v571 = vld [vmem:[#allocation5 + $0xf0] sm:$0xff]
    %v572 = vld [vmem:[#allocation5 + $0xf8] sm:$0xff]
    %v573 = vld [vmem:[#allocation5 + $0x100] sm:$0xff]
    %v574 = vld [vmem:[#allocation5 + $0x108] sm:$0xff]
    %v575 = vld [vmem:[#allocation5 + $0x110] sm:$0xff]
    %v576 = vld [vmem:[#allocation5 + $0x118] sm:$0xff]
    %v577 = vld [vmem:[#allocation5 + $0x120] sm:$0xff]
    %v578 = vld [vmem:[#allocation5 + $0x128] sm:$0xff]
    %v579 = vld [vmem:[#allocation5 + $0x130] sm:$0xff]
    %v580 = vld [vmem:[#allocation5 + $0x138] sm:$0xff]
    %v581 = vld [vmem:[#allocation5 + $0x140] sm:$0xff]
    %v582 = vld [vmem:[#allocation5 + $0x148] sm:$0xff]
    %v583 = vld [vmem:[#allocation5 + $0x150] sm:$0xff]
    %v584 = vld [vmem:[#allocation5 + $0x158] sm:$0xff]
    %v585 = vld [vmem:[#allocation5 + $0x160] sm:$0xff]
    %v586 = vld [vmem:[#allocation5 + $0x168] sm:$0xff]
    %v587 = vld [vmem:[#allocation5 + $0x170] sm:$0xff]
    %v588 = vld [vmem:[#allocation5 + $0x178] sm:$0xff]
    %v589 = vld [vmem:[#allocation5 + $0x180] sm:$0xff]
    %v590 = vld [vmem:[#allocation5 + $0x188] sm:$0xff]
    %v591 = vld [vmem:[#allocation5 + $0x190] sm:$0xff]
    %v592 = vld [vmem:[#allocation5 + $0x198] sm:$0xff]
    %v593 = vld [vmem:[#allocation5 + $0x1a0] sm:$0xff]
    %v594 = vld [vmem:[#allocation5 + $0x1a8] sm:$0xff]
    %v595 = vld [vmem:[#allocation5 + $0x1b0] sm:$0xff]
    %v596 = vld [vmem:[#allocation5 + $0x1b8] sm:$0xff]
    %v597 = vld [vmem:[#allocation5 + $0x1c0] sm:$0xff]
    %v598 = vld [vmem:[#allocation5 + $0x1c8] sm:$0xff]
    %v599 = vld [vmem:[#allocation5 + $0x1d0] sm:$0xff]
    %v600 = vld [vmem:[#allocation5 + $0x1d8] sm:$0xff]
    %v601 = vld [vmem:[#allocation5 + $0x1e0] sm:$0xff]
    %v602 = vld [vmem:[#allocation5 + $0x1e8] sm:$0xff]
    %v603 = vld [vmem:[#allocation5 + $0x1f0] sm:$0xff]
    %v604 = vld [vmem:[#allocation5 + $0x1f8] sm:$0xff]
    %v605 = vld [vmem:[#allocation5 + $0x200] sm:$0xff]
    %v606 = vld [vmem:[#allocation5 + $0x208] sm:$0xff]
    %v607 = vld [vmem:[#allocation5 + $0x210] sm:$0xff]
    %v608 = vld [vmem:[#allocation5 + $0x218] sm:$0xff]
    %v609 = vld [vmem:[#allocation5 + $0x220] sm:$0xff]
    %v610 = vld [vmem:[#allocation5 + $0x228] sm:$0xff]
    %v611 = vld [vmem:[#allocation5 + $0x230] sm:$0xff]
    %v612 = vld [vmem:[#allocation5 + $0x238] sm:$0xff]
    %v613 = vld [vmem:[#allocation5 + $0x240] sm:$0xff]
    %v614 = vld [vmem:[#allocation5 + $0x248] sm:$0xff]
    %v615 = vld [vmem:[#allocation5 + $0x250] sm:$0xff]
    %v616 = vld [vmem:[#allocation5 + $0x258] sm:$0xff]
    %v617 = vld [vmem:[#allocation5 + $0x260] sm:$0xff]
    %v618 = vld [vmem:[#allocation5 + $0x268] sm:$0xff]
    %v619 = vld [vmem:[#allocation5 + $0x270] sm:$0xff]
    %v620 = vld [vmem:[#allocation5 + $0x278] sm:$0xff]
    %v621 = vld [vmem:[#allocation5 + $0x280] sm:$0xff]
    %v622 = vld [vmem:[#allocation5 + $0x288] sm:$0xff]
    %v623 = vld [vmem:[#allocation5 + $0x290] sm:$0xff]
    %v624 = vld [vmem:[#allocation5 + $0x298] sm:$0xff]
    %v625 = vld [vmem:[#allocation5 + $0x2a0] sm:$0xff]
    %v626 = vld [vmem:[#allocation5 + $0x2a8] sm:$0xff]
    %v627 = vld [vmem:[#allocation5 + $0x2b0] sm:$0xff]
    %v628 = vld [vmem:[#allocation5 + $0x2b8] sm:$0xff]
    %v629 = vld [vmem:[#allocation5 + $0x2c0] sm:$0xff]
    %v630 = vld [vmem:[#allocation5 + $0x2c8] sm:$0xff]
    %v631 = vld [vmem:[#allocation5 + $0x2d0] sm:$0xff]
    %v632 = vld [vmem:[#allocation5 + $0x2d8] sm:$0xff]
    %v633 = vld [vmem:[#allocation5 + $0x2e0] sm:$0xff]
    %v634 = vld [vmem:[#allocation5 + $0x2e8] sm:$0xff]
    %v635 = vld [vmem:[#allocation5 + $0x2f0] sm:$0xff]
    %v636 = vld [vmem:[#allocation5 + $0x2f8] sm:$0xff]
    %v637 = vld [vmem:[#allocation5 + $0x300] sm:$0xff]
    %v638 = vld [vmem:[#allocation5 + $0x308] sm:$0xff]
    %v639 = vld [vmem:[#allocation5 + $0x310] sm:$0xff]
    %v640 = vld [vmem:[#allocation5 + $0x318] sm:$0xff]
    %v641 = vld [vmem:[#allocation5 + $0x320] sm:$0xff]
    %v642 = vld [vmem:[#allocation5 + $0x328] sm:$0xff]
    %v643 = vld [vmem:[#allocation5 + $0x330] sm:$0xff]
    %v644 = vld [vmem:[#allocation5 + $0x338] sm:$0xff]
    %v645 = vld [vmem:[#allocation5 + $0x340] sm:$0xff]
    %v646 = vld [vmem:[#allocation5 + $0x348] sm:$0xff]
    %v647 = vld [vmem:[#allocation5 + $0x350] sm:$0xff]
    %v648 = vld [vmem:[#allocation5 + $0x358] sm:$0xff]
    %v649 = vld [vmem:[#allocation5 + $0x360] sm:$0xff]
    %v650 = vld [vmem:[#allocation5 + $0x368] sm:$0xff]
    %v651 = vld [vmem:[#allocation5 + $0x370] sm:$0xff]
    %v652 = vld [vmem:[#allocation5 + $0x378] sm:$0xff]
    %v653 = vld [vmem:[#allocation5 + $0x380] sm:$0xff]
    %v654 = vld [vmem:[#allocation5 + $0x388] sm:$0xff]
    %v655 = vld [vmem:[#allocation5 + $0x390] sm:$0xff]
    %v656 = vld [vmem:[#allocation5 + $0x398] sm:$0xff]
    %v657 = vld [vmem:[#allocation5 + $0x3a0] sm:$0xff]
    %v658 = vld [vmem:[#allocation5 + $0x3a8] sm:$0xff]
    %v659 = vld [vmem:[#allocation5 + $0x3b0] sm:$0xff]
    %v660 = vld [vmem:[#allocation5 + $0x3b8] sm:$0xff]
    %v661 = vld [vmem:[#allocation5 + $0x3c0] sm:$0xff]
    %v662 = vld [vmem:[#allocation5 + $0x3c8] sm:$0xff]
    %v663 = vld [vmem:[#allocation5 + $0x3d0] sm:$0xff]
    %v664 = vld [vmem:[#allocation5 + $0x3d8] sm:$0xff]
    %v665 = vld [vmem:[#allocation5 + $0x3e0] sm:$0xff]
    %v666 = vld [vmem:[#allocation5 + $0x3e8] sm:$0xff]
    %v667 = vld [vmem:[#allocation5 + $0x3f0] sm:$0xff]
    %v668 = vld [vmem:[#allocation5 + $0x3f8] sm:$0xff]
    %669 = vmatprep.subr.mxu0 %v542
    %670 = vmatpush1.msra.mxu0 %v541
    %671 = vmatprep.subr.mxu0 %v544
    %672 = vmatpush1.msra.mxu0 %v543
    %673 = vmatprep.subr.mxu0 %v546
    %674 = vmatpush1.msra.mxu0 %v545
    %675 = vmatprep.subr.mxu0 %v548
    %676 = vmatpush1.msra.mxu0 %v547
    %677 = vmatprep.subr.mxu0 %v550
    %678 = vmatpush1.msra.mxu0 %v549
    %679 = vmatprep.subr.mxu0 %v552
    %680 = vmatpush1.msra.mxu0 %v551
    %681 = vmatprep.subr.mxu0 %v554
    %682 = vmatpush1.msra.mxu0 %v553
    %683 = vmatprep.subr.mxu0 %v556
    %684 = vmatpush1.msra.mxu0 %v555
    %685 = vmatprep.subr.mxu0 %v558
    %686 = vmatpush1.msra.mxu0 %v557
    %687 = vmatprep.subr.mxu0 %v560
    %688 = vmatpush1.msra.mxu0 %v559
    %689 = vmatprep.subr.mxu0 %v562
    %690 = vmatpush1.msra.mxu0 %v561
    %691 = vmatprep.subr.mxu0 %v564
    %692 = vmatpush1.msra.mxu0 %v563
    %693 = vmatprep.subr.mxu0 %v566
    %694 = vmatpush1.msra.mxu0 %v565
    %695 = vmatprep.subr.mxu0 %v568
    %696 = vmatpush1.msra.mxu0 %v567
    %697 = vmatprep.subr.mxu0 %v570
    %698 = vmatpush1.msra.mxu0 %v569
    %699 = vmatprep.subr.mxu0 %v572
    %700 = vmatpush1.msra.mxu0 %v571
    %701 = vmatprep.subr.mxu0 %v574
    %702 = vmatpush1.msra.mxu0 %v573
    %703 = vmatprep.subr.mxu0 %v576
    %704 = vmatpush1.msra.mxu0 %v575
    %705 = vmatprep.subr.mxu0 %v578
    %706 = vmatpush1.msra.mxu0 %v577
    %707 = vmatprep.subr.mxu0 %v580
    %708 = vmatpush1.msra.mxu0 %v579
    %709 = vmatprep.subr.mxu0 %v582
    %710 = vmatpush1.msra.mxu0 %v581
    %711 = vmatprep.subr.mxu0 %v584
    %712 = vmatpush1.msra.mxu0 %v583
    %713 = vmatprep.subr.mxu0 %v586
    %714 = vmatpush1.msra.mxu0 %v585
    %715 = vmatprep.subr.mxu0 %v588
    %716 = vmatpush1.msra.mxu0 %v587
    %717 = vmatprep.subr.mxu0 %v590
    %718 = vmatpush1.msra.mxu0 %v589
    %719 = vmatprep.subr.mxu0 %v592
    %720 = vmatpush1.msra.mxu0 %v591
    %721 = vmatprep.subr.mxu0 %v594
    %722 = vmatpush1.msra.mxu0 %v593
    %723 = vmatprep.subr.mxu0 %v596
    %724 = vmatpush1.msra.mxu0 %v595
    %725 = vmatprep.subr.mxu0 %v598
    %726 = vmatpush1.msra.mxu0 %v597
    %727 = vmatprep.subr.mxu0 %v600
    %728 = vmatpush1.msra.mxu0 %v599
    %729 = vmatprep.subr.mxu0 %v602
    %730 = vmatpush1.msra.mxu0 %v601
    %731 = vmatprep.subr.mxu0 %v604
    %732 = vmatpush1.msra.mxu0 %v603
    %733 = vmatprep.mubr.f32.mxu0 %v530
    %734 = vmatmul.mubr.f32.gmra.mrb[0].mxu0 %v529
    %v735 = vpop.f32.mrb[0].mxu0
    %v736 = vadd.f32 0.0, %v735
    %v737 = vpop.f32.mrb[0].mxu0
    %v738 = vadd.f32 0.0, %v737
    %739 = vdwg.mxu0
    %740 = vmatprep.subr.mxu0 %v606
    %741 = vmatpush1.msra.mxu0 %v605
    %742 = vmatprep.subr.mxu0 %v608
    %743 = vmatpush1.msra.mxu0 %v607
    %744 = vmatprep.subr.mxu0 %v610
    %745 = vmatpush1.msra.mxu0 %v609
    %746 = vmatprep.subr.mxu0 %v612
    %747 = vmatpush1.msra.mxu0 %v611
    %748 = vmatprep.subr.mxu0 %v614
    %749 = vmatpush1.msra.mxu0 %v613
    %750 = vmatprep.subr.mxu0 %v616
    %751 = vmatpush1.msra.mxu0 %v615
    %752 = vmatprep.subr.mxu0 %v618
    %753 = vmatpush1.msra.mxu0 %v617
    %754 = vmatprep.subr.mxu0 %v620
    %755 = vmatpush1.msra.mxu0 %v619
    %756 = vmatprep.subr.mxu0 %v622
    %757 = vmatpush1.msra.mxu0 %v621
    %758 = vmatprep.subr.mxu0 %v624
    %759 = vmatpush1.msra.mxu0 %v623
    %760 = vmatprep.subr.mxu0 %v626
    %761 = vmatpush1.msra.mxu0 %v625
    %762 = vmatprep.subr.mxu0 %v628
    %763 = vmatpush1.msra.mxu0 %v627
    %764 = vmatprep.subr.mxu0 %v630
    %765 = vmatpush1.msra.mxu0 %v629
    %766 = vmatprep.subr.mxu0 %v632
    %767 = vmatpush1.msra.mxu0 %v631
    %768 = vmatprep.subr.mxu0 %v634
    %769 = vmatpush1.msra.mxu0 %v633
    %770 = vmatprep.subr.mxu0 %v636
    %771 = vmatpush1.msra.mxu0 %v635
    %772 = vmatprep.subr.mxu0 %v638
    %773 = vmatpush1.msra.mxu0 %v637
    %774 = vmatprep.subr.mxu0 %v640
    %775 = vmatpush1.msra.mxu0 %v639
    %776 = vmatprep.subr.mxu0 %v642
    %777 = vmatpush1.msra.mxu0 %v641
    %778 = vmatprep.subr.mxu0 %v644
    %779 = vmatpush1.msra.mxu0 %v643
    %780 = vmatprep.subr.mxu0 %v646
    %781 = vmatpush1.msra.mxu0 %v645
    %782 = vmatprep.subr.mxu0 %v648
    %783 = vmatpush1.msra.mxu0 %v647
    %784 = vmatprep.subr.mxu0 %v650
    %785 = vmatpush1.msra.mxu0 %v649
    %786 = vmatprep.subr.mxu0 %v652
    %787 = vmatpush1.msra.mxu0 %v651
    %788 = vmatprep.subr.mxu0 %v654
    %789 = vmatpush1.msra.mxu0 %v653
    %790 = vmatprep.subr.mxu0 %v656
    %791 = vmatpush1.msra.mxu0 %v655
    %792 = vmatprep.subr.mxu0 %v658
    %793 = vmatpush1.msra.mxu0 %v657
    %794 = vmatprep.subr.mxu0 %v660
    %795 = vmatpush1.msra.mxu0 %v659
    %796 = vmatprep.subr.mxu0 %v662
    %797 = vmatpush1.msra.mxu0 %v661
    %798 = vmatprep.subr.mxu0 %v664
    %799 = vmatpush1.msra.mxu0 %v663
    %800 = vmatprep.subr.mxu0 %v666
    %801 = vmatpush1.msra.mxu0 %v665
    %802 = vmatprep.subr.mxu0 %v668
    %803 = vmatpush1.msra.mxu0 %v667
    %804 = vmatprep.mubr.f32.mxu0 %v538
    %805 = vmatmul.mubr.f32.gmra.mrb[0].mxu0 %v537
    %v806 = vpop.f32.mrb[0].mxu0
    %v807 = vadd.f32 %v736, %v806
    %v808 = vpop.f32.mrb[0].mxu0
    %v809 = vadd.f32 %v738, %v808
    %810 = vdwg.mxu0
    %v811 = vxor.u32 %v807, 2147483648
    %v812 = vxor.u32 %v809, 2147483648
    %v813 = vmul.f32 %v811, 1.442695
    %v814 = vpow.pop %v813
    %v815 = vmul.f32 %v812, 1.442695
    %v816 = vpow.pop %v815
    %v817 = vadd.f32 %v814, 1.0
    %v818 = vadd.f32 %v816, 1.0
    %v819 = vrcp.pop %v817
    %v820 = vmul.f32 1.0, %v819
    %v821 = vrcp.pop %v818
    %v822 = vmul.f32 1.0, %v821
    %v825 = vcombine.low %v820, %v822
    %v827 = vunpack.c.l.s4 1966171168
    %v828 = vunpack.c.0.s8 %v827
    %v829 = vlaneseq
    %v830 = vshrl.u32 %v829, 7
    %v831 = vsub.s32 %v828, %v830
    %v832 = vrot.slane %v825, %v831
    %v833 = vcombine.high %v832, %v832
    %v835 = vunpack.c.l.s4 1966171168
    %v836 = vunpack.c.0.s8 %v835
    %v837 = vlaneseq
    %v838 = vshrl.u32 %v837, 7
    %v839 = vsub.s32 %v836, %v838
    %v840 = vrot.slane %v832, %v839
    %v842 = vunpack.c.l.s4 1966171168
    %v843 = vunpack.c.0.s8 %v842
    %v844 = vlaneseq
    %v845 = vshrl.u32 %v844, 7
    %v846 = vsub.s32 %v843, %v845
    %v847 = vrot.slane %v833, %v846
    %v848 = vlaneseq
    %v849 = vshrl.u32 %v848, 7
    %v850 = vsub.s32 0, %v849
    %v851 = vrot.slane %v840, %v850
    %v852 = vlaneseq
    %v853 = vshrl.u32 %v852, 7
    %v854 = vsub.s32 1, %v853
    %v855 = vrot.slane %v840, %v854
    %v856 = vlaneseq
    %v857 = vshrl.u32 %v856, 7
    %v858 = vsub.s32 0, %v857
    %v859 = vrot.slane %v847, %v858
    %v860 = vlaneseq
    %v861 = vshrl.u32 %v860, 7
    %v862 = vsub.s32 1, %v861
    %v863 = vrot.slane %v847, %v862
    %v868 = vmul.f32 %v432, %v851
    %v869 = vmul.f32 %v433, %v855
    %v870 = vmul.f32 %v434, %v851
    %v871 = vmul.f32 %v435, %v855
    %v872 = vmul.f32 %v436, %v851
    %v873 = vmul.f32 %v437, %v855
    %v874 = vmul.f32 %v438, %v851
    %v875 = vmul.f32 %v439, %v855
    %v876 = vmul.f32 %v440, %v859
    %v877 = vmul.f32 %v441, %v863
    %v878 = vmul.f32 %v442, %v859
    %v879 = vmul.f32 %v443, %v863
    %v880 = vmul.f32 %v444, %v859
    %v881 = vmul.f32 %v445, %v863
    %v882 = vmul.f32 %v446, %v859
    %v883 = vmul.f32 %v447, %v863
    %884 = vst [vmem:[#allocation7] sm:$0xff] %v868
    %885 = vst [vmem:[#allocation7 + $0x8] sm:$0xff] %v869
    %886 = vst [vmem:[#allocation7 + $0x10] sm:$0xff] %v870
    %887 = vst [vmem:[#allocation7 + $0x18] sm:$0xff] %v871
    %888 = vst [vmem:[#allocation7 + $0x20] sm:$0xff] %v872
    %889 = vst [vmem:[#allocation7 + $0x28] sm:$0xff] %v873
    %890 = vst [vmem:[#allocation7 + $0x30] sm:$0xff] %v874
    %891 = vst [vmem:[#allocation7 + $0x38] sm:$0xff] %v875
    %892 = vst [vmem:[#allocation7 + $0x40] sm:$0xff] %v876
    %893 = vst [vmem:[#allocation7 + $0x48] sm:$0xff] %v877
    %894 = vst [vmem:[#allocation7 + $0x50] sm:$0xff] %v878
    %895 = vst [vmem:[#allocation7 + $0x58] sm:$0xff] %v879
    %896 = vst [vmem:[#allocation7 + $0x60] sm:$0xff] %v880
    %897 = vst [vmem:[#allocation7 + $0x68] sm:$0xff] %v881
    %898 = vst [vmem:[#allocation7 + $0x70] sm:$0xff] %v882
    %899 = vst [vmem:[#allocation7 + $0x78] sm:$0xff] %v883
    // Predicated region
    $region26: #{tpu_custom_call.1} parent=1 // pred_check
      _
    $region27: #{tpu_custom_call.1} parent=1 // pred_check_branch
      %901 = sbr.rel (0) target = $region29
    $region28: #{tpu_custom_call.1} parent=1 // pred_region
      %s903 = ssub.s32 2048, 2048
      %904 = vsyncadd [#allocation4], %s903
      %s905 = sshll.u32 [#allocation7], 4
      %s906 = int_to_ptr.vmem [resolvable:$true] %s905
      %911 = dma.vmem_to_hbm [thread:$0]  %s906, 2048, %s4, [#allocation4], 256, 256, 16
    $region29: #{tpu_custom_call.1} parent=1 // pred_fallthru
      _
    // Predicated region
    $region30: #{tpu_custom_call.1} parent=1 // pred_check
      _
    $region31: #{tpu_custom_call.1} parent=1 // pred_check_branch
      %913 = sbr.rel (0) target = $region33
    $region32: #{tpu_custom_call.1} parent=1 // pred_region
      %914 = dma.done [#allocation4], 2048
    $region33: #{tpu_custom_call.1} parent=1 // pred_fallthru
      _
    %915 = vsyncpa [#allocation3], 1
    %916 = vsyncpa [#allocation6], 1
    %917 = vsyncpa [#allocation4], 1

</llo_original>
